<compile_context>
chip_gen: v7x
topology: tpu7x:2x2x1
jax: 0.10.0
libtpu: 0.0.40
codegen_flags: <defaults>
</compile_context>

<pallas_src>
import functools
import math

import jax
import jax.numpy as jnp
from jax.experimental import pallas as pl
from jax.experimental.pallas import tpu as pltpu

EPS = 1e-5


def _layernorm(x, gamma, beta):
    """Single-pass LayerNorm: reduce E[x] and E[x^2] together, var = E[x^2]-E[x]^2."""
    mean = jnp.mean(x, axis=-1, keepdims=True)
    mean_sq = jnp.mean(x * x, axis=-1, keepdims=True)
    var = mean_sq - mean * mean
    return (x - mean) * jax.lax.rsqrt(var + EPS) * gamma + beta


def encoder_layer_kernel(x_ref,
                         wqkv_ref, bqkv_ref, wo_ref, bo_ref,
                         ln1_g_ref, ln1_b_ref,
                         w1_ref, b1_ref, w2_ref, b2_ref,
                         ln2_g_ref, ln2_b_ref,
                         fng_ref, fnb_ref,
                         o_ref, *, nhead, apply_final_norm):
    """One post-norm TransformerEncoderLayer for a single batch element.

    Blocks: x_ref / o_ref are (1, S, D) (one batch element per grid step);
    weights are whole arrays (constant index_map keeps them VMEM-resident).
    Matmul operands are bf16, accumulation f32; all elementwise / LN / softmax
    math stays in f32 (v5e has no bf16 VPU path).
    """
    _, S, D = x_ref.shape
    H = nhead
    Hd = D // H
    scale = 1.0 / math.sqrt(Hd)

    x = x_ref[0]                                    # (S, D) f32
    x_bf = x.astype(jnp.bfloat16)

    # ---- fused QKV projection: one MXU pass with N = 3D ----
    qkv = jnp.dot(x_bf, wqkv_ref[...],
                  preferred_element_type=jnp.float32) + bqkv_ref[...]    # (S, 3D)
    q = qkv[:, 0 * D:1 * D] * scale
    k = qkv[:, 1 * D:2 * D]
    v = qkv[:, 2 * D:3 * D]

    # ---- all heads batched in two einsums (head axis leading => no internal
    # ---- transposes of bf16 operands) ----
    qh = jnp.transpose(q.reshape(S, H, Hd), (1, 0, 2)).astype(jnp.bfloat16)  # (H,S,Hd)
    kh = jnp.transpose(k.reshape(S, H, Hd), (1, 0, 2)).astype(jnp.bfloat16)
    vh = jnp.transpose(v.reshape(S, H, Hd), (1, 0, 2)).astype(jnp.bfloat16)

    # TODO(synk): for long sequences, replace the materialized (H,S,S) scores
    # with a flash-style online softmax over KV tiles (caps VMEM at O(S*Hd)).
    scores = jnp.einsum('hqd,hkd->hqk', qh, kh,
                        preferred_element_type=jnp.float32)              # (H, S, S)
    scores = scores - jnp.max(scores, axis=-1, keepdims=True)
    p = jnp.exp(scores)
    denom = jnp.sum(p, axis=-1, keepdims=True)
    p = p * pl.reciprocal(denom, approx=True)        # EUP recip, frees VALU slots

    ctx = jnp.einsum('hqk,hkd->hqd', p.astype(jnp.bfloat16), vh,
                     preferred_element_type=jnp.float32)                 # (H, S, Hd)
    ctx = jnp.transpose(ctx, (1, 0, 2)).reshape(S, D)                    # (S, D)

    attn = jnp.dot(ctx.astype(jnp.bfloat16), wo_ref[...],
                   preferred_element_type=jnp.float32) + bo_ref[...]

    # residual + LayerNorm1 (dropout1 == identity in eval)
    h1 = _layernorm(x + attn, ln1_g_ref[...], ln1_b_ref[...])

    # feed-forward: linear1 -> relu -> linear2 (dropout == identity)
    f = jnp.dot(h1.astype(jnp.bfloat16), w1_ref[...],
                preferred_element_type=jnp.float32) + b1_ref[...]
    f = jnp.maximum(f, 0.0)
    f = jnp.dot(f.astype(jnp.bfloat16), w2_ref[...],
                preferred_element_type=jnp.float32) + b2_ref[...]

    # residual + LayerNorm2 (dropout2 == identity)
    out = _layernorm(h1 + f, ln2_g_ref[...], ln2_b_ref[...])

    if apply_final_norm:   # static flag: TransformerEncoder's final norm fused here
        out = _layernorm(out, fng_ref[...], fnb_ref[...])

    o_ref[0] = out


# ----------------------------- wrappers ------------------------------------

def run_encoder_layer(x_bsd, layer_params, final_norm_params, nhead,
                      apply_final_norm):
    B, S, D = x_bsd.shape
    if final_norm_params is None:
        # dummies (unused when apply_final_norm=False)
        final_norm_params = (jnp.ones((1, D), jnp.float32),
                             jnp.zeros((1, D), jnp.float32))
    params = tuple(layer_params) + tuple(final_norm_params)

    act_spec = pl.BlockSpec((1, S, D), lambda b: (b, 0, 0))
    # Weights / biases: whole array, same block every grid step -> stay in VMEM.
    param_specs = [pl.BlockSpec(p.shape, lambda b: (0, 0)) for p in params]

    return pl.pallas_call(
        functools.partial(encoder_layer_kernel, nhead=nhead,
                          apply_final_norm=apply_final_norm),
        out_shape=jax.ShapeDtypeStruct((B, S, D), jnp.float32),
        grid=(B,),
        in_specs=[act_spec] + param_specs,
        out_specs=act_spec,
        compiler_params=pltpu.CompilerParams(
            dimension_semantics=("parallel",)),      # megacore sharding on v7x
    )(x_bsd, *params)


def transformer_encoder(src_sbd, layers_params, final_norm_params, nhead):
    """src_sbd: (seq, batch, d_model) (PyTorch convention). Returns same shape."""
    # TODO(synk): the boundary transposes could be folded away by blocking
    # directly on the (seq, batch, d_model) layout; kept for clarity here.
    x = jnp.transpose(src_sbd, (1, 0, 2))            # -> (batch, seq, d_model)
    n = len(layers_params)
    for i, lp in enumerate(layers_params):
        is_last = (i == n - 1)
        use_final = is_last and (final_norm_params is not None)
        x = run_encoder_layer(x, lp,
                              final_norm_params if use_final else None,
                              nhead, apply_final_norm=use_final)
    return jnp.transpose(x, (1, 0, 2))               # -> (seq, batch, d_model)


# --------------------------- parameter init ---------------------------------

def _xavier_uniform(key, fan_in, fan_out):
    limit = (6.0 / (fan_in + fan_out)) ** 0.5
    return jax.random.uniform(key, (fan_in, fan_out), jnp.float32, -limit, limit)


def init_encoder_layer_params(key, d_model, dim_ff):
    ks = jax.random.split(key, 6)
    wq = _xavier_uniform(ks[0], d_model, d_model)
    wk = _xavier_uniform(ks[1], d_model, d_model)
    wv = _xavier_uniform(ks[2], d_model, d_model)
    # packed (D, 3D) weight for the fused QKV matmul; bf16 MXU operands
    wqkv = jnp.concatenate([wq, wk, wv], axis=1).astype(jnp.bfloat16)
    wo = _xavier_uniform(ks[3], d_model, d_model).astype(jnp.bfloat16)
    w1 = _xavier_uniform(ks[4], d_model, dim_ff).astype(jnp.bfloat16)
    w2 = _xavier_uniform(ks[5], dim_ff, d_model).astype(jnp.bfloat16)
    zD = jnp.zeros((1, d_model), jnp.float32)
    z3D = jnp.zeros((1, 3 * d_model), jnp.float32)
    zF = jnp.zeros((1, dim_ff), jnp.float32)
    ones = jnp.ones((1, d_model), jnp.float32)
    # order must match encoder_layer_kernel signature
    return (wqkv, z3D, wo, zD,        # fused QKV / output projection
            ones, zD,                 # LayerNorm1 gamma / beta
            w1, zF, w2, zD,           # FFN weights / biases
            ones, zD)                 # LayerNorm2 gamma / beta


# ------------------------------- main ---------------------------------------

if __name__ == "__main__":
    SEQ, BATCH, D_MODEL = 8, 2, 32
    NHEAD, DIM_FF, NUM_LAYERS = 4, 64, 2

    root = jax.random.PRNGKey(0)
    k_src, k_params, k_norm = jax.random.split(root, 3)

    src = jax.random.normal(k_src, (SEQ, BATCH, D_MODEL), jnp.float32)

    layer_keys = jax.random.split(k_params, NUM_LAYERS)
    layers_params = [init_encoder_layer_params(k, D_MODEL, DIM_FF) for k in layer_keys]

    # optional final norm (TransformerEncoder(norm=LayerNorm(d_model))), fused
    # into the last layer's kernel
    final_norm = (jnp.ones((1, D_MODEL), jnp.float32),
                  jnp.zeros((1, D_MODEL), jnp.float32))

    out = transformer_encoder(src, layers_params, final_norm, NHEAD)
    out = jax.block_until_ready(out)

    assert out.shape == (SEQ, BATCH, D_MODEL)
    assert jnp.all(jnp.isfinite(out))
    print("KERNEL_OK")
</pallas_src>

<mosaic_0001>
module attributes {stable_mosaic.version = 11 : i64} {
  func.func @encoder_layer_kernel(%arg0: i32, %arg1: memref<1x8x32xf32, #tpu.memory_space<vmem>>, %arg2: memref<32x96xbf16, #tpu.memory_space<vmem>>, %arg3: memref<1x96xf32, #tpu.memory_space<vmem>>, %arg4: memref<32x32xbf16, #tpu.memory_space<vmem>>, %arg5: memref<1x32xf32, #tpu.memory_space<vmem>>, %arg6: memref<1x32xf32, #tpu.memory_space<vmem>>, %arg7: memref<1x32xf32, #tpu.memory_space<vmem>>, %arg8: memref<32x64xbf16, #tpu.memory_space<vmem>>, %arg9: memref<1x64xf32, #tpu.memory_space<vmem>>, %arg10: memref<64x32xbf16, #tpu.memory_space<vmem>>, %arg11: memref<1x32xf32, #tpu.memory_space<vmem>>, %arg12: memref<1x32xf32, #tpu.memory_space<vmem>>, %arg13: memref<1x32xf32, #tpu.memory_space<vmem>>, %arg14: memref<1x32xf32, #tpu.memory_space<vmem>>, %arg15: memref<1x32xf32, #tpu.memory_space<vmem>>, %arg16: memref<1x8x32xf32, #tpu.memory_space<vmem>>) attributes {dimension_semantics = [#tpu.dimension_semantics<parallel>], iteration_bounds = array<i64: 2>, scalar_prefetch = 0 : i64, scratch_operands = 0 : i64, tpu.core_type = #tpu.core_type<tc>, window_params = [{transform_indices = @transform_0, window_bounds = array<i64: 1, 8, 32>}, {pipeline_mode = #tpu.pipeline_mode<synchronous>, transform_indices = @transform_1, window_bounds = array<i64: 32, 96>}, {pipeline_mode = #tpu.pipeline_mode<synchronous>, transform_indices = @transform_2, window_bounds = array<i64: 1, 96>}, {pipeline_mode = #tpu.pipeline_mode<synchronous>, transform_indices = @transform_3, window_bounds = array<i64: 32, 32>}, {pipeline_mode = #tpu.pipeline_mode<synchronous>, transform_indices = @transform_4, window_bounds = array<i64: 1, 32>}, {pipeline_mode = #tpu.pipeline_mode<synchronous>, transform_indices = @transform_5, window_bounds = array<i64: 1, 32>}, {pipeline_mode = #tpu.pipeline_mode<synchronous>, transform_indices = @transform_6, window_bounds = array<i64: 1, 32>}, {pipeline_mode = #tpu.pipeline_mode<synchronous>, transform_indices = @transform_7, window_bounds = array<i64: 32, 64>}, {pipeline_mode = #tpu.pipeline_mode<synchronous>, transform_indices = @transform_8, window_bounds = array<i64: 1, 64>}, {pipeline_mode = #tpu.pipeline_mode<synchronous>, transform_indices = @transform_9, window_bounds = array<i64: 64, 32>}, {pipeline_mode = #tpu.pipeline_mode<synchronous>, transform_indices = @transform_10, window_bounds = array<i64: 1, 32>}, {pipeline_mode = #tpu.pipeline_mode<synchronous>, transform_indices = @transform_11, window_bounds = array<i64: 1, 32>}, {pipeline_mode = #tpu.pipeline_mode<synchronous>, transform_indices = @transform_12, window_bounds = array<i64: 1, 32>}, {pipeline_mode = #tpu.pipeline_mode<synchronous>, transform_indices = @transform_13, window_bounds = array<i64: 1, 32>}, {pipeline_mode = #tpu.pipeline_mode<synchronous>, transform_indices = @transform_14, window_bounds = array<i64: 1, 32>}, {transform_indices = @transform_15, window_bounds = array<i64: 1, 8, 32>}]} {
    %c0 = arith.constant 0 : index
    %c0_0 = arith.constant 0 : index
    %c0_1 = arith.constant 0 : index
    %0 = vector.load %arg1[%c0, %c0_0, %c0_1] : memref<1x8x32xf32, #tpu.memory_space<vmem>>, vector<1x8x32xf32>
    %1 = vector.shape_cast %0 : vector<1x8x32xf32> to vector<8x32xf32>
    %2 = arith.truncf %1 : vector<8x32xf32> to vector<8x32xbf16>
    %c0_2 = arith.constant 0 : index
    %c0_3 = arith.constant 0 : index
    %3 = vector.load %arg2[%c0_2, %c0_3] : memref<32x96xbf16, #tpu.memory_space<vmem>>, vector<32x96xbf16>
    %cst = arith.constant dense<0.000000e+00> : vector<8x96xf32>
    %4 = tpu.matmul %2, %3, %cst {dimension_numbers = #tpu.dot_dimension_numbers<[1], [0], [0], [1], [0, 0, 1, 1], [], []>} : vector<8x32xbf16>, vector<32x96xbf16>, vector<8x96xf32> -> vector<8x96xf32>
    %c0_4 = arith.constant 0 : index
    %c0_5 = arith.constant 0 : index
    %5 = vector.load %arg3[%c0_4, %c0_5] : memref<1x96xf32, #tpu.memory_space<vmem>>, vector<1x96xf32>
    %6 = vector.broadcast %5 : vector<1x96xf32> to vector<8x96xf32>
    %7 = arith.addf %4, %6 : vector<8x96xf32>
    %8 = vector.extract_strided_slice %7 {offsets = [0, 0], sizes = [8, 32], strides = [1, 1]} : vector<8x96xf32> to vector<8x32xf32>
    %cst_6 = arith.constant 0.353553385 : f32
    %9 = vector.broadcast %cst_6 : f32 to vector<8x32xf32>
    %10 = arith.mulf %8, %9 : vector<8x32xf32>
    %11 = vector.extract_strided_slice %7 {offsets = [0, 32], sizes = [8, 32], strides = [1, 1]} : vector<8x96xf32> to vector<8x32xf32>
    %12 = vector.extract_strided_slice %7 {offsets = [0, 64], sizes = [8, 32], strides = [1, 1]} : vector<8x96xf32> to vector<8x32xf32>
    %13 = vector.shape_cast %10 : vector<8x32xf32> to vector<8x4x8xf32>
    %14 = tpu.transpose %13, [1, 0, 2] : vector<8x4x8xf32> -> vector<4x8x8xf32>
    %15 = arith.truncf %14 : vector<4x8x8xf32> to vector<4x8x8xbf16>
    %16 = vector.shape_cast %11 : vector<8x32xf32> to vector<8x4x8xf32>
    %17 = tpu.transpose %16, [1, 0, 2] : vector<8x4x8xf32> -> vector<4x8x8xf32>
    %18 = arith.truncf %17 : vector<4x8x8xf32> to vector<4x8x8xbf16>
    %19 = vector.shape_cast %12 : vector<8x32xf32> to vector<8x4x8xf32>
    %20 = tpu.transpose %19, [1, 0, 2] : vector<8x4x8xf32> -> vector<4x8x8xf32>
    %21 = arith.truncf %20 : vector<4x8x8xf32> to vector<4x8x8xbf16>
    "tpu.trace_start"() <{level = 10 : i32, message = "hqd,hkd->hqk"}> : () -> ()
    %cst_7 = arith.constant dense<0.000000e+00> : vector<4x8x8xf32>
    %22 = tpu.matmul %15, %18, %cst_7 {dimension_numbers = #tpu.dot_dimension_numbers<[2], [2], [1], [1], [0, 0, 0, 1, 1, 1], [0], [0]>} : vector<4x8x8xbf16>, vector<4x8x8xbf16>, vector<4x8x8xf32> -> vector<4x8x8xf32>
    "tpu.trace_stop"() : () -> ()
    %cst_8 = arith.constant dense<0xFF800000> : vector<4x8xf32>
    %23 = vector.multi_reduction <maximumf>, %22, %cst_8 [2] : vector<4x8x8xf32> to vector<4x8xf32>
    %24 = vector.shape_cast %23 : vector<4x8xf32> to vector<4x8x1xf32>
    %25 = vector.broadcast %24 : vector<4x8x1xf32> to vector<4x8x8xf32>
    %26 = arith.subf %22, %25 : vector<4x8x8xf32>
    %27 = math.exp %26 : vector<4x8x8xf32>
    %cst_9 = arith.constant dense<0.000000e+00> : vector<4x8xf32>
    %28 = vector.multi_reduction <add>, %27, %cst_9 [2] : vector<4x8x8xf32> to vector<4x8xf32>
    %29 = vector.shape_cast %28 : vector<4x8xf32> to vector<4x8x1xf32>
    %30 = tpu.reciprocal %29 {approx = true} : vector<4x8x1xf32> -> vector<4x8x1xf32>
    %31 = vector.broadcast %30 : vector<4x8x1xf32> to vector<4x8x8xf32>
    %32 = arith.mulf %27, %31 : vector<4x8x8xf32>
    %33 = arith.truncf %32 : vector<4x8x8xf32> to vector<4x8x8xbf16>
    "tpu.trace_start"() <{level = 10 : i32, message = "hqk,hkd->hqd"}> : () -> ()
    %cst_10 = arith.constant dense<0.000000e+00> : vector<4x8x8xf32>
    %34 = tpu.matmul %33, %21, %cst_10 {dimension_numbers = #tpu.dot_dimension_numbers<[2], [1], [1], [2], [0, 0, 0, 1, 1, 2], [0], [0]>} : vector<4x8x8xbf16>, vector<4x8x8xbf16>, vector<4x8x8xf32> -> vector<4x8x8xf32>
    "tpu.trace_stop"() : () -> ()
    %35 = tpu.transpose %34, [1, 0, 2] : vector<4x8x8xf32> -> vector<8x4x8xf32>
    %36 = vector.shape_cast %35 : vector<8x4x8xf32> to vector<8x32xf32>
    %37 = arith.truncf %36 : vector<8x32xf32> to vector<8x32xbf16>
    %c0_11 = arith.constant 0 : index
    %c0_12 = arith.constant 0 : index
    %38 = vector.load %arg4[%c0_11, %c0_12] : memref<32x32xbf16, #tpu.memory_space<vmem>>, vector<32x32xbf16>
    %cst_13 = arith.constant dense<0.000000e+00> : vector<8x32xf32>
    %39 = tpu.matmul %37, %38, %cst_13 {dimension_numbers = #tpu.dot_dimension_numbers<[1], [0], [0], [1], [0, 0, 1, 1], [], []>} : vector<8x32xbf16>, vector<32x32xbf16>, vector<8x32xf32> -> vector<8x32xf32>
    %c0_14 = arith.constant 0 : index
    %c0_15 = arith.constant 0 : index
    %40 = vector.load %arg5[%c0_14, %c0_15] : memref<1x32xf32, #tpu.memory_space<vmem>>, vector<1x32xf32>
    %41 = vector.broadcast %40 : vector<1x32xf32> to vector<8x32xf32>
    %42 = arith.addf %39, %41 : vector<8x32xf32>
    %43 = arith.addf %1, %42 : vector<8x32xf32>
    %c0_16 = arith.constant 0 : index
    %c0_17 = arith.constant 0 : index
    %44 = vector.load %arg6[%c0_16, %c0_17] : memref<1x32xf32, #tpu.memory_space<vmem>>, vector<1x32xf32>
    %c0_18 = arith.constant 0 : index
    %c0_19 = arith.constant 0 : index
    %45 = vector.load %arg7[%c0_18, %c0_19] : memref<1x32xf32, #tpu.memory_space<vmem>>, vector<1x32xf32>
    %cst_20 = arith.constant dense<0.000000e+00> : vector<8xf32>
    %46 = vector.multi_reduction <add>, %43, %cst_20 [1] : vector<8x32xf32> to vector<8xf32>
    %47 = vector.shape_cast %46 : vector<8xf32> to vector<8x1xf32>
    %cst_21 = arith.constant 3.200000e+01 : f32
    %48 = vector.broadcast %cst_21 : f32 to vector<8x1xf32>
    %49 = arith.divf %47, %48 : vector<8x1xf32>
    %50 = arith.mulf %43, %43 : vector<8x32xf32>
    %cst_22 = arith.constant dense<0.000000e+00> : vector<8xf32>
    %51 = vector.multi_reduction <add>, %50, %cst_22 [1] : vector<8x32xf32> to vector<8xf32>
    %52 = vector.shape_cast %51 : vector<8xf32> to vector<8x1xf32>
    %cst_23 = arith.constant 3.200000e+01 : f32
    %53 = vector.broadcast %cst_23 : f32 to vector<8x1xf32>
    %54 = arith.divf %52, %53 : vector<8x1xf32>
    %55 = arith.mulf %49, %49 : vector<8x1xf32>
    %56 = arith.subf %54, %55 : vector<8x1xf32>
    %57 = vector.broadcast %49 : vector<8x1xf32> to vector<8x32xf32>
    %58 = arith.subf %43, %57 : vector<8x32xf32>
    %cst_24 = arith.constant 9.99999974E-6 : f32
    %59 = vector.broadcast %cst_24 : f32 to vector<8x1xf32>
    %60 = arith.addf %56, %59 : vector<8x1xf32>
    %61 = math.rsqrt %60 : vector<8x1xf32>
    %62 = vector.broadcast %61 : vector<8x1xf32> to vector<8x32xf32>
    %63 = arith.mulf %58, %62 : vector<8x32xf32>
    %64 = vector.broadcast %44 : vector<1x32xf32> to vector<8x32xf32>
    %65 = arith.mulf %63, %64 : vector<8x32xf32>
    %66 = vector.broadcast %45 : vector<1x32xf32> to vector<8x32xf32>
    %67 = arith.addf %65, %66 : vector<8x32xf32>
    %68 = arith.truncf %67 : vector<8x32xf32> to vector<8x32xbf16>
    %c0_25 = arith.constant 0 : index
    %c0_26 = arith.constant 0 : index
    %69 = vector.load %arg8[%c0_25, %c0_26] : memref<32x64xbf16, #tpu.memory_space<vmem>>, vector<32x64xbf16>
    %cst_27 = arith.constant dense<0.000000e+00> : vector<8x64xf32>
    %70 = tpu.matmul %68, %69, %cst_27 {dimension_numbers = #tpu.dot_dimension_numbers<[1], [0], [0], [1], [0, 0, 1, 1], [], []>} : vector<8x32xbf16>, vector<32x64xbf16>, vector<8x64xf32> -> vector<8x64xf32>
    %c0_28 = arith.constant 0 : index
    %c0_29 = arith.constant 0 : index
    %71 = vector.load %arg9[%c0_28, %c0_29] : memref<1x64xf32, #tpu.memory_space<vmem>>, vector<1x64xf32>
    %72 = vector.broadcast %71 : vector<1x64xf32> to vector<8x64xf32>
    %73 = arith.addf %70, %72 : vector<8x64xf32>
    %cst_30 = arith.constant 0.000000e+00 : f32
    %74 = vector.broadcast %cst_30 : f32 to vector<8x64xf32>
    %75 = arith.maximumf %73, %74 : vector<8x64xf32>
    %76 = arith.truncf %75 : vector<8x64xf32> to vector<8x64xbf16>
    %c0_31 = arith.constant 0 : index
    %c0_32 = arith.constant 0 : index
    %77 = vector.load %arg10[%c0_31, %c0_32] : memref<64x32xbf16, #tpu.memory_space<vmem>>, vector<64x32xbf16>
    %cst_33 = arith.constant dense<0.000000e+00> : vector<8x32xf32>
    %78 = tpu.matmul %76, %77, %cst_33 {dimension_numbers = #tpu.dot_dimension_numbers<[1], [0], [0], [1], [0, 0, 1, 1], [], []>} : vector<8x64xbf16>, vector<64x32xbf16>, vector<8x32xf32> -> vector<8x32xf32>
    %c0_34 = arith.constant 0 : index
    %c0_35 = arith.constant 0 : index
    %79 = vector.load %arg11[%c0_34, %c0_35] : memref<1x32xf32, #tpu.memory_space<vmem>>, vector<1x32xf32>
    %80 = vector.broadcast %79 : vector<1x32xf32> to vector<8x32xf32>
    %81 = arith.addf %78, %80 : vector<8x32xf32>
    %82 = arith.addf %67, %81 : vector<8x32xf32>
    %c0_36 = arith.constant 0 : index
    %c0_37 = arith.constant 0 : index
    %83 = vector.load %arg12[%c0_36, %c0_37] : memref<1x32xf32, #tpu.memory_space<vmem>>, vector<1x32xf32>
    %c0_38 = arith.constant 0 : index
    %c0_39 = arith.constant 0 : index
    %84 = vector.load %arg13[%c0_38, %c0_39] : memref<1x32xf32, #tpu.memory_space<vmem>>, vector<1x32xf32>
    %cst_40 = arith.constant dense<0.000000e+00> : vector<8xf32>
    %85 = vector.multi_reduction <add>, %82, %cst_40 [1] : vector<8x32xf32> to vector<8xf32>
    %86 = vector.shape_cast %85 : vector<8xf32> to vector<8x1xf32>
    %cst_41 = arith.constant 3.200000e+01 : f32
    %87 = vector.broadcast %cst_41 : f32 to vector<8x1xf32>
    %88 = arith.divf %86, %87 : vector<8x1xf32>
    %89 = arith.mulf %82, %82 : vector<8x32xf32>
    %cst_42 = arith.constant dense<0.000000e+00> : vector<8xf32>
    %90 = vector.multi_reduction <add>, %89, %cst_42 [1] : vector<8x32xf32> to vector<8xf32>
    %91 = vector.shape_cast %90 : vector<8xf32> to vector<8x1xf32>
    %cst_43 = arith.constant 3.200000e+01 : f32
    %92 = vector.broadcast %cst_43 : f32 to vector<8x1xf32>
    %93 = arith.divf %91, %92 : vector<8x1xf32>
    %94 = arith.mulf %88, %88 : vector<8x1xf32>
    %95 = arith.subf %93, %94 : vector<8x1xf32>
    %96 = vector.broadcast %88 : vector<8x1xf32> to vector<8x32xf32>
    %97 = arith.subf %82, %96 : vector<8x32xf32>
    %cst_44 = arith.constant 9.99999974E-6 : f32
    %98 = vector.broadcast %cst_44 : f32 to vector<8x1xf32>
    %99 = arith.addf %95, %98 : vector<8x1xf32>
    %100 = math.rsqrt %99 : vector<8x1xf32>
    %101 = vector.broadcast %100 : vector<8x1xf32> to vector<8x32xf32>
    %102 = arith.mulf %97, %101 : vector<8x32xf32>
    %103 = vector.broadcast %83 : vector<1x32xf32> to vector<8x32xf32>
    %104 = arith.mulf %102, %103 : vector<8x32xf32>
    %105 = vector.broadcast %84 : vector<1x32xf32> to vector<8x32xf32>
    %106 = arith.addf %104, %105 : vector<8x32xf32>
    %c0_45 = arith.constant 0 : index
    %c0_46 = arith.constant 0 : index
    %c0_47 = arith.constant 0 : index
    %107 = vector.load %arg16[%c0_45, %c0_46, %c0_47] : memref<1x8x32xf32, #tpu.memory_space<vmem>>, vector<1x8x32xf32>
    %108 = vector.shape_cast %107 : vector<1x8x32xf32> to vector<8x32xf32>
    %109 = vector.shape_cast %106 : vector<8x32xf32> to vector<1x8x32xf32>
    tpu.vector_store %arg16[%c0_45, %c0_46, %c0_47], %109 {strides = array<i32>} : memref<1x8x32xf32, #tpu.memory_space<vmem>>, vector<1x8x32xf32>,
    return
  }
  func.func @transform_0(%arg0: i32) -> (i32, i32, i32) {
    %c0_i32 = arith.constant 0 : i32
    %c0_i32_0 = arith.constant 0 : i32
    %c0_i32_1 = arith.constant 0 : i32
    return %arg0, %c0_i32, %c0_i32_0 : i32, i32, i32
  }
  func.func @transform_1(%arg0: i32) -> (i32, i32) {
    %c0_i32 = arith.constant 0 : i32
    %c0_i32_0 = arith.constant 0 : i32
    %c0_i32_1 = arith.constant 0 : i32
    return %c0_i32, %c0_i32_0 : i32, i32
  }
  func.func @transform_2(%arg0: i32) -> (i32, i32) {
    %c0_i32 = arith.constant 0 : i32
    %c0_i32_0 = arith.constant 0 : i32
    %c0_i32_1 = arith.constant 0 : i32
    return %c0_i32, %c0_i32_0 : i32, i32
  }
  func.func @transform_3(%arg0: i32) -> (i32, i32) {
    %c0_i32 = arith.constant 0 : i32
    %c0_i32_0 = arith.constant 0 : i32
    %c0_i32_1 = arith.constant 0 : i32
    return %c0_i32, %c0_i32_0 : i32, i32
  }
  func.func @transform_4(%arg0: i32) -> (i32, i32) {
    %c0_i32 = arith.constant 0 : i32
    %c0_i32_0 = arith.constant 0 : i32
    %c0_i32_1 = arith.constant 0 : i32
    return %c0_i32, %c0_i32_0 : i32, i32
  }
  func.func @transform_5(%arg0: i32) -> (i32, i32) {
    %c0_i32 = arith.constant 0 : i32
    %c0_i32_0 = arith.constant 0 : i32
    %c0_i32_1 = arith.constant 0 : i32
    return %c0_i32, %c0_i32_0 : i32, i32
  }
  func.func @transform_6(%arg0: i32) -> (i32, i32) {
    %c0_i32 = arith.constant 0 : i32
    %c0_i32_0 = arith.constant 0 : i32
    %c0_i32_1 = arith.constant 0 : i32
    return %c0_i32, %c0_i32_0 : i32, i32
  }
  func.func @transform_7(%arg0: i32) -> (i32, i32) {
    %c0_i32 = arith.constant 0 : i32
    %c0_i32_0 = arith.constant 0 : i32
    %c0_i32_1 = arith.constant 0 : i32
    return %c0_i32, %c0_i32_0 : i32, i32
  }
  func.func @transform_8(%arg0: i32) -> (i32, i32) {
    %c0_i32 = arith.constant 0 : i32
    %c0_i32_0 = arith.constant 0 : i32
    %c0_i32_1 = arith.constant 0 : i32
    return %c0_i32, %c0_i32_0 : i32, i32
  }
  func.func @transform_9(%arg0: i32) -> (i32, i32) {
    %c0_i32 = arith.constant 0 : i32
    %c0_i32_0 = arith.constant 0 : i32
    %c0_i32_1 = arith.constant 0 : i32
    return %c0_i32, %c0_i32_0 : i32, i32
  }
  func.func @transform_10(%arg0: i32) -> (i32, i32) {
    %c0_i32 = arith.constant 0 : i32
    %c0_i32_0 = arith.constant 0 : i32
    %c0_i32_1 = arith.constant 0 : i32
    return %c0_i32, %c0_i32_0 : i32, i32
  }
  func.func @transform_11(%arg0: i32) -> (i32, i32) {
    %c0_i32 = arith.constant 0 : i32
    %c0_i32_0 = arith.constant 0 : i32
    %c0_i32_1 = arith.constant 0 : i32
    return %c0_i32, %c0_i32_0 : i32, i32
  }
  func.func @transform_12(%arg0: i32) -> (i32, i32) {
    %c0_i32 = arith.constant 0 : i32
    %c0_i32_0 = arith.constant 0 : i32
    %c0_i32_1 = arith.constant 0 : i32
    return %c0_i32, %c0_i32_0 : i32, i32
  }
  func.func @transform_13(%arg0: i32) -> (i32, i32) {
    %c0_i32 = arith.constant 0 : i32
    %c0_i32_0 = arith.constant 0 : i32
    %c0_i32_1 = arith.constant 0 : i32
    return %c0_i32, %c0_i32_0 : i32, i32
  }
  func.func @transform_14(%arg0: i32) -> (i32, i32) {
    %c0_i32 = arith.constant 0 : i32
    %c0_i32_0 = arith.constant 0 : i32
    %c0_i32_1 = arith.constant 0 : i32
    return %c0_i32, %c0_i32_0 : i32, i32
  }
  func.func @transform_15(%arg0: i32) -> (i32, i32, i32) {
    %c0_i32 = arith.constant 0 : i32
    %c0_i32_0 = arith.constant 0 : i32
    %c0_i32_1 = arith.constant 0 : i32
    return %arg0, %c0_i32, %c0_i32_0 : i32, i32, i32
  }
}

</mosaic_0001>

<llo_original>
// kernel: tpu_custom_call.1
$region0: #{tpu_custom_call.1}
  #allocation0 [shape = 'u32[]', space=smem, size = 0x4, offset = 0x4, fixed_abs, tag = 'smem constant byte address 0x4 - core index']
  #allocation1 [shape = 'u32[144,128]{1,0:T(1,128)}', space=vmem, size = 0x12000, scoped, tag = 'internal scratch']
  %s0 = inlined_call_operand.vmem [shape: f32[2,8,32], index: 0, kind: input, shape index: {}]
  %s1 = inlined_call_operand.vmem [shape: bf16[32,96], index: 1, kind: input, shape index: {}]
  %s2 = inlined_call_operand.vmem [shape: f32[1,96], index: 2, kind: input, shape index: {}]
  %s3 = inlined_call_operand.vmem [shape: bf16[32,32], index: 3, kind: input, shape index: {}]
  %s4 = inlined_call_operand.vmem [shape: f32[1,32], index: 4, kind: input, shape index: {}]
  %s5 = inlined_call_operand.vmem [shape: f32[1,32], index: 5, kind: input, shape index: {}]
  %s6 = inlined_call_operand.vmem [shape: f32[1,32], index: 6, kind: input, shape index: {}]
  %s7 = inlined_call_operand.hbm [shape: bf16[32,64], index: 7, kind: input, shape index: {}]
  %s8 = inlined_call_operand.vmem [shape: f32[1,64], index: 8, kind: input, shape index: {}]
  %s9 = inlined_call_operand.vmem [shape: bf16[64,32], index: 9, kind: input, shape index: {}]
  %s10 = inlined_call_operand.vmem [shape: f32[1,32], index: 10, kind: input, shape index: {}]
  %s11 = inlined_call_operand.vmem [shape: f32[1,32], index: 11, kind: input, shape index: {}]
  %s12 = inlined_call_operand.vmem [shape: f32[1,32], index: 12, kind: input, shape index: {}]
  %s13 = inlined_call_operand.vmem [shape: f32[1,32], index: 13, kind: input, shape index: {}]
  %s14 = inlined_call_operand.vmem [shape: f32[1,32], index: 14, kind: input, shape index: {}]
  %s15 = inlined_call_operand.hbm [shape: f32[2,8,32], index: 15, kind: output, shape index: {}]
  %s16 = sld [smem:[#allocation0]]
  $region97: #{tpu_custom_call.1} parent=0
    _
  %s18 = ssub.s32 1, %s16
  %s19 = scalar_select 0, %s18, %s16
  $region1: #{tpu_custom_call.1} parent=0
    #allocation2 [shape = 'u8[8192]{0}', space=vmem, size = 0x2000, scoped, tag = 'input window, operand 7, single buffered']
    #allocation3 [shape = 's32[2]{0}', space=sflag, size = 0x8, scoped, tag = 'scoped memory for tpu_custom_call.1']
    #allocation4 [shape = 's32[2]{0}', space=sflag, size = 0x8, scoped, tag = 'scoped memory for tpu_custom_call.1']
    #allocation5 [shape = 'u8[8192]{0}', space=vmem, size = 0x2000, scoped, tag = 'output window, operand 0']
    %20 = vsyncpa [#allocation3], 0
    %21 = vsyncpa [#allocation4], 0
    %s22 = scalar_lea.sflag [#allocation4], 1
    %23 = vsyncpa %s22, 0
    loop: start=0, step=1, limit=4
    $region2: #{tpu_custom_call.1} parent=1 // loop_pre_header
      _
    $region3: #{tpu_custom_call.1} parent=1 // loop_header
      %s25 = sphi 0, %s29
      %p26 = scmp.ge.s32.totalorder %s25, 4
      %s35 = sphi 0, %s37
      %s38 = sphi 0, %s35
      %s39 = sphi 0, %s38
      %s55 = sphi 0, %s39
      %s59 = sphi 0, %s59
      %s61 = sphi 0, %s59
      %s62 = sphi 0, %s61
      %s76 = sphi 0, %s62
      %s80 = sphi 0, %s80
      %s82 = sphi 0, %s80
      %s83 = sphi 0, %s82
      %s97 = sphi 0, %s83
      %s101 = sphi 0, %s101
      %s103 = sphi 0, %s101
      %s104 = sphi 0, %s103
      %s118 = sphi 0, %s104
      %s122 = sphi 0, %s122
      %s124 = sphi 0, %s122
      %s125 = sphi 0, %s124
      %s139 = sphi 0, %s125
      %s143 = sphi 0, %s143
      %s145 = sphi 0, %s143
      %s146 = sphi 0, %s145
      %s160 = sphi 0, %s146
      %s164 = sphi 0, %s164
      %s166 = sphi 0, %s164
      %s167 = sphi 0, %s166
      %s181 = sphi 0, %s167
      %s185 = sphi 0, %s185
      %s187 = sphi 0, %s185
      %s188 = sphi 0, %s187
      %s202 = sphi 0, %s188
      %s206 = sphi 0, %s206
      %s208 = sphi 0, %s206
      %s209 = sphi 0, %s208
      %s223 = sphi 0, %s209
      %s227 = sphi 0, %s227
      %s229 = sphi 0, %s227
      %s230 = sphi 0, %s229
      %s244 = sphi 0, %s230
      %s248 = sphi 0, %s248
      %s250 = sphi 0, %s248
      %s251 = sphi 0, %s250
      %s265 = sphi 0, %s251
      %s269 = sphi 0, %s269
      %s271 = sphi 0, %s269
      %s272 = sphi 0, %s271
      %s286 = sphi 0, %s272
      %s290 = sphi 0, %s290
      %s292 = sphi 0, %s290
      %s293 = sphi 0, %s292
      %s307 = sphi 0, %s293
      %s311 = sphi 0, %s311
      %s313 = sphi 0, %s311
      %s314 = sphi 0, %s313
      %s328 = sphi 0, %s314
      %s332 = sphi 0, %s332
      %s334 = sphi 0, %s332
      %s335 = sphi 0, %s334
      %s349 = sphi 0, %s335
      %s355 = sphi 0, %s357
      %s358 = sphi 0, %s355
      %s359 = sphi 0, %s358
      %s375 = sphi 0, %s359
    $region4: #{tpu_custom_call.1} parent=1 // loop_header_branch
      %28 = sbr.rel (%p26) target = $region8
    $region5: #{tpu_custom_call.1} parent=1 // loop_body
      %s30 = ssub.s32 %s25, 1
      %s31 = ssub.s32 %s25, 2
      %s32 = sadd.s32 %s25, 1
      %s33 = ssub.s32 %s25, %s32
      %p34 = scmp.eq.s32.totalorder %s33, 0
      %s36 = sadd.s32 %s35, 1
      %s37 = scalar_select %p34, %s35, %s36
      %p40 = pneg %p34
      %p41 = scmp.eq.s32.totalorder %s25, 1
      %p42 = por %p40, %p41
      %p43 = scmp.ne.s32.totalorder %s35, %s38
      %p44 = scmp.eq.s32.totalorder %s25, 0
      %p45 = por %p43, %p44
      %p46 = scmp.ne.s32.totalorder %s35, %s38
      %p47 = scmp.eq.s32.totalorder %s30, 1
      %p48 = por %p46, %p47
      %p49 = scmp.ne.s32.totalorder %s38, %s39
      %p50 = scmp.eq.s32.totalorder %s30, 0
      %p51 = por %p49, %p50
      %p52 = scmp.ne.s32.totalorder %s38, %s39
      %p53 = scmp.eq.s32.totalorder %s31, 1
      %p54 = por %p52, %p53
      %p56 = scmp.ne.s32.totalorder %s39, %s55
      %p57 = scmp.eq.s32.totalorder %s31, 0
      %p58 = por %p56, %p57
      %s60 = sadd.s32 %s59, 1
      %p63 = scmp.eq.s32.totalorder %s25, 1
      %p64 = scmp.ne.s32.totalorder %s59, %s61
      %p65 = scmp.eq.s32.totalorder %s25, 0
      %p66 = por %p64, %p65
      %p67 = scmp.ne.s32.totalorder %s59, %s61
      %p68 = scmp.eq.s32.totalorder %s30, 1
      %p69 = por %p67, %p68
      %p70 = scmp.ne.s32.totalorder %s61, %s62
      %p71 = scmp.eq.s32.totalorder %s30, 0
      %p72 = por %p70, %p71
      %p73 = scmp.ne.s32.totalorder %s61, %s62
      %p74 = scmp.eq.s32.totalorder %s31, 1
      %p75 = por %p73, %p74
      %p77 = scmp.ne.s32.totalorder %s62, %s76
      %p78 = scmp.eq.s32.totalorder %s31, 0
      %p79 = por %p77, %p78
      %s81 = sadd.s32 %s80, 1
      %p84 = scmp.eq.s32.totalorder %s25, 1
      %p85 = scmp.ne.s32.totalorder %s80, %s82
      %p86 = scmp.eq.s32.totalorder %s25, 0
      %p87 = por %p85, %p86
      %p88 = scmp.ne.s32.totalorder %s80, %s82
      %p89 = scmp.eq.s32.totalorder %s30, 1
      %p90 = por %p88, %p89
      %p91 = scmp.ne.s32.totalorder %s82, %s83
      %p92 = scmp.eq.s32.totalorder %s30, 0
      %p93 = por %p91, %p92
      %p94 = scmp.ne.s32.totalorder %s82, %s83
      %p95 = scmp.eq.s32.totalorder %s31, 1
      %p96 = por %p94, %p95
      %p98 = scmp.ne.s32.totalorder %s83, %s97
      %p99 = scmp.eq.s32.totalorder %s31, 0
      %p100 = por %p98, %p99
      %s102 = sadd.s32 %s101, 1
      %p105 = scmp.eq.s32.totalorder %s25, 1
      %p106 = scmp.ne.s32.totalorder %s101, %s103
      %p107 = scmp.eq.s32.totalorder %s25, 0
      %p108 = por %p106, %p107
      %p109 = scmp.ne.s32.totalorder %s101, %s103
      %p110 = scmp.eq.s32.totalorder %s30, 1
      %p111 = por %p109, %p110
      %p112 = scmp.ne.s32.totalorder %s103, %s104
      %p113 = scmp.eq.s32.totalorder %s30, 0
      %p114 = por %p112, %p113
      %p115 = scmp.ne.s32.totalorder %s103, %s104
      %p116 = scmp.eq.s32.totalorder %s31, 1
      %p117 = por %p115, %p116
      %p119 = scmp.ne.s32.totalorder %s104, %s118
      %p120 = scmp.eq.s32.totalorder %s31, 0
      %p121 = por %p119, %p120
      %s123 = sadd.s32 %s122, 1
      %p126 = scmp.eq.s32.totalorder %s25, 1
      %p127 = scmp.ne.s32.totalorder %s122, %s124
      %p128 = scmp.eq.s32.totalorder %s25, 0
      %p129 = por %p127, %p128
      %p130 = scmp.ne.s32.totalorder %s122, %s124
      %p131 = scmp.eq.s32.totalorder %s30, 1
      %p132 = por %p130, %p131
      %p133 = scmp.ne.s32.totalorder %s124, %s125
      %p134 = scmp.eq.s32.totalorder %s30, 0
      %p135 = por %p133, %p134
      %p136 = scmp.ne.s32.totalorder %s124, %s125
      %p137 = scmp.eq.s32.totalorder %s31, 1
      %p138 = por %p136, %p137
      %p140 = scmp.ne.s32.totalorder %s125, %s139
      %p141 = scmp.eq.s32.totalorder %s31, 0
      %p142 = por %p140, %p141
      %s144 = sadd.s32 %s143, 1
      %p147 = scmp.eq.s32.totalorder %s25, 1
      %p148 = scmp.ne.s32.totalorder %s143, %s145
      %p149 = scmp.eq.s32.totalorder %s25, 0
      %p150 = por %p148, %p149
      %p151 = scmp.ne.s32.totalorder %s143, %s145
      %p152 = scmp.eq.s32.totalorder %s30, 1
      %p153 = por %p151, %p152
      %p154 = scmp.ne.s32.totalorder %s145, %s146
      %p155 = scmp.eq.s32.totalorder %s30, 0
      %p156 = por %p154, %p155
      %p157 = scmp.ne.s32.totalorder %s145, %s146
      %p158 = scmp.eq.s32.totalorder %s31, 1
      %p159 = por %p157, %p158
      %p161 = scmp.ne.s32.totalorder %s146, %s160
      %p162 = scmp.eq.s32.totalorder %s31, 0
      %p163 = por %p161, %p162
      %s165 = sadd.s32 %s164, 1
      %p168 = scmp.eq.s32.totalorder %s25, 1
      %p169 = scmp.ne.s32.totalorder %s164, %s166
      %p170 = scmp.eq.s32.totalorder %s25, 0
      %p171 = por %p169, %p170
      %p172 = scmp.ne.s32.totalorder %s164, %s166
      %p173 = scmp.eq.s32.totalorder %s30, 1
      %p174 = por %p172, %p173
      %p175 = scmp.ne.s32.totalorder %s166, %s167
      %p176 = scmp.eq.s32.totalorder %s30, 0
      %p177 = por %p175, %p176
      %p178 = scmp.ne.s32.totalorder %s166, %s167
      %p179 = scmp.eq.s32.totalorder %s31, 1
      %p180 = por %p178, %p179
      %p182 = scmp.ne.s32.totalorder %s167, %s181
      %p183 = scmp.eq.s32.totalorder %s31, 0
      %p184 = por %p182, %p183
      %s186 = sadd.s32 %s185, 1
      %p189 = scmp.eq.s32.totalorder %s25, 1
      %p190 = scmp.ne.s32.totalorder %s185, %s187
      %p191 = scmp.eq.s32.totalorder %s25, 0
      %p192 = por %p190, %p191
      %p193 = scmp.ne.s32.totalorder %s185, %s187
      %p194 = scmp.eq.s32.totalorder %s30, 1
      %p195 = por %p193, %p194
      %p196 = scmp.ne.s32.totalorder %s187, %s188
      %p197 = scmp.eq.s32.totalorder %s30, 0
      %p198 = por %p196, %p197
      %p199 = scmp.ne.s32.totalorder %s187, %s188
      %p200 = scmp.eq.s32.totalorder %s31, 1
      %p201 = por %p199, %p200
      %p203 = scmp.ne.s32.totalorder %s188, %s202
      %p204 = scmp.eq.s32.totalorder %s31, 0
      %p205 = por %p203, %p204
      %s207 = sadd.s32 %s206, 1
      %p210 = scmp.eq.s32.totalorder %s25, 1
      %p211 = scmp.ne.s32.totalorder %s206, %s208
      %p212 = scmp.eq.s32.totalorder %s25, 0
      %p213 = por %p211, %p212
      %p214 = scmp.ne.s32.totalorder %s206, %s208
      %p215 = scmp.eq.s32.totalorder %s30, 1
      %p216 = por %p214, %p215
      %p217 = scmp.ne.s32.totalorder %s208, %s209
      %p218 = scmp.eq.s32.totalorder %s30, 0
      %p219 = por %p217, %p218
      %p220 = scmp.ne.s32.totalorder %s208, %s209
      %p221 = scmp.eq.s32.totalorder %s31, 1
      %p222 = por %p220, %p221
      %p224 = scmp.ne.s32.totalorder %s209, %s223
      %p225 = scmp.eq.s32.totalorder %s31, 0
      %p226 = por %p224, %p225
      %s228 = sadd.s32 %s227, 1
      %p231 = scmp.eq.s32.totalorder %s25, 1
      %p232 = scmp.ne.s32.totalorder %s227, %s229
      %p233 = scmp.eq.s32.totalorder %s25, 0
      %p234 = por %p232, %p233
      %p235 = scmp.ne.s32.totalorder %s227, %s229
      %p236 = scmp.eq.s32.totalorder %s30, 1
      %p237 = por %p235, %p236
      %p238 = scmp.ne.s32.totalorder %s229, %s230
      %p239 = scmp.eq.s32.totalorder %s30, 0
      %p240 = por %p238, %p239
      %p241 = scmp.ne.s32.totalorder %s229, %s230
      %p242 = scmp.eq.s32.totalorder %s31, 1
      %p243 = por %p241, %p242
      %p245 = scmp.ne.s32.totalorder %s230, %s244
      %p246 = scmp.eq.s32.totalorder %s31, 0
      %p247 = por %p245, %p246
      %s249 = sadd.s32 %s248, 1
      %p252 = scmp.eq.s32.totalorder %s25, 1
      %p253 = scmp.ne.s32.totalorder %s248, %s250
      %p254 = scmp.eq.s32.totalorder %s25, 0
      %p255 = por %p253, %p254
      %p256 = scmp.ne.s32.totalorder %s248, %s250
      %p257 = scmp.eq.s32.totalorder %s30, 1
      %p258 = por %p256, %p257
      %p259 = scmp.ne.s32.totalorder %s250, %s251
      %p260 = scmp.eq.s32.totalorder %s30, 0
      %p261 = por %p259, %p260
      %p262 = scmp.ne.s32.totalorder %s250, %s251
      %p263 = scmp.eq.s32.totalorder %s31, 1
      %p264 = por %p262, %p263
      %p266 = scmp.ne.s32.totalorder %s251, %s265
      %p267 = scmp.eq.s32.totalorder %s31, 0
      %p268 = por %p266, %p267
      %s270 = sadd.s32 %s269, 1
      %p273 = scmp.eq.s32.totalorder %s25, 1
      %p274 = scmp.ne.s32.totalorder %s269, %s271
      %p275 = scmp.eq.s32.totalorder %s25, 0
      %p276 = por %p274, %p275
      %p277 = scmp.ne.s32.totalorder %s269, %s271
      %p278 = scmp.eq.s32.totalorder %s30, 1
      %p279 = por %p277, %p278
      %p280 = scmp.ne.s32.totalorder %s271, %s272
      %p281 = scmp.eq.s32.totalorder %s30, 0
      %p282 = por %p280, %p281
      %p283 = scmp.ne.s32.totalorder %s271, %s272
      %p284 = scmp.eq.s32.totalorder %s31, 1
      %p285 = por %p283, %p284
      %p287 = scmp.ne.s32.totalorder %s272, %s286
      %p288 = scmp.eq.s32.totalorder %s31, 0
      %p289 = por %p287, %p288
      %s291 = sadd.s32 %s290, 1
      %p294 = scmp.eq.s32.totalorder %s25, 1
      %p295 = scmp.ne.s32.totalorder %s290, %s292
      %p296 = scmp.eq.s32.totalorder %s25, 0
      %p297 = por %p295, %p296
      %p298 = scmp.ne.s32.totalorder %s290, %s292
      %p299 = scmp.eq.s32.totalorder %s30, 1
      %p300 = por %p298, %p299
      %p301 = scmp.ne.s32.totalorder %s292, %s293
      %p302 = scmp.eq.s32.totalorder %s30, 0
      %p303 = por %p301, %p302
      %p304 = scmp.ne.s32.totalorder %s292, %s293
      %p305 = scmp.eq.s32.totalorder %s31, 1
      %p306 = por %p304, %p305
      %p308 = scmp.ne.s32.totalorder %s293, %s307
      %p309 = scmp.eq.s32.totalorder %s31, 0
      %p310 = por %p308, %p309
      %s312 = sadd.s32 %s311, 1
      %p315 = scmp.eq.s32.totalorder %s25, 1
      %p316 = scmp.ne.s32.totalorder %s311, %s313
      %p317 = scmp.eq.s32.totalorder %s25, 0
      %p318 = por %p316, %p317
      %p319 = scmp.ne.s32.totalorder %s311, %s313
      %p320 = scmp.eq.s32.totalorder %s30, 1
      %p321 = por %p319, %p320
      %p322 = scmp.ne.s32.totalorder %s313, %s314
      %p323 = scmp.eq.s32.totalorder %s30, 0
      %p324 = por %p322, %p323
      %p325 = scmp.ne.s32.totalorder %s313, %s314
      %p326 = scmp.eq.s32.totalorder %s31, 1
      %p327 = por %p325, %p326
      %p329 = scmp.ne.s32.totalorder %s314, %s328
      %p330 = scmp.eq.s32.totalorder %s31, 0
      %p331 = por %p329, %p330
      %s333 = sadd.s32 %s332, 1
      %p336 = scmp.eq.s32.totalorder %s25, 1
      %p337 = scmp.ne.s32.totalorder %s332, %s334
      %p338 = scmp.eq.s32.totalorder %s25, 0
      %p339 = por %p337, %p338
      %p340 = scmp.ne.s32.totalorder %s332, %s334
      %p341 = scmp.eq.s32.totalorder %s30, 1
      %p342 = por %p340, %p341
      %p343 = scmp.ne.s32.totalorder %s334, %s335
      %p344 = scmp.eq.s32.totalorder %s30, 0
      %p345 = por %p343, %p344
      %p346 = scmp.ne.s32.totalorder %s334, %s335
      %p347 = scmp.eq.s32.totalorder %s31, 1
      %p348 = por %p346, %p347
      %p350 = scmp.ne.s32.totalorder %s335, %s349
      %p351 = scmp.eq.s32.totalorder %s31, 0
      %p352 = por %p350, %p351
      %s353 = ssub.s32 %s25, %s32
      %p354 = scmp.eq.s32.totalorder %s353, 0
      %s356 = sadd.s32 %s355, 1
      %s357 = scalar_select %p354, %s355, %s356
      %p360 = pneg %p354
      %p361 = scmp.eq.s32.totalorder %s25, 1
      %p362 = por %p360, %p361
      %p363 = scmp.ne.s32.totalorder %s355, %s358
      %p364 = scmp.eq.s32.totalorder %s25, 0
      %p365 = por %p363, %p364
      %p366 = scmp.ne.s32.totalorder %s355, %s358
      %p367 = scmp.eq.s32.totalorder %s30, 1
      %p368 = por %p366, %p367
      %p369 = scmp.ne.s32.totalorder %s358, %s359
      %p370 = scmp.eq.s32.totalorder %s30, 0
      %p371 = por %p369, %p370
      %p372 = scmp.ne.s32.totalorder %s358, %s359
      %p373 = scmp.eq.s32.totalorder %s31, 1
      %p374 = por %p372, %p373
      %p376 = scmp.ne.s32.totalorder %s359, %s375
      %p377 = scmp.eq.s32.totalorder %s31, 0
      %p378 = por %p376, %p377
      %p379 = scmp.le.s32.totalorder 1, %s25
      %p380 = scmp.lt.s32.totalorder %s25, 3
      %p381 = pnand %p379, %p380
      %p382 = pneg %p381
      // Predicated region
      $region9: #{tpu_custom_call.1} parent=5 // pred_check
        _
      $region10: #{tpu_custom_call.1} parent=5 // pred_check_branch
        %384 = sbr.rel (%p381) target = $region12
      $region11: #{tpu_custom_call.1} parent=5 // pred_region
        %s385 = ssub.s32 %s25, 1
        // Predicated region
        $region13: #{tpu_custom_call.1} parent=11 // pred_check
          %p386 = pneg %p72
        $region14: #{tpu_custom_call.1} parent=11 // pred_check_branch
          %388 = sbr.rel (%p386) target = $region16
        $region15: #{tpu_custom_call.1} parent=11 // pred_region
          _
        $region16: #{tpu_custom_call.1} parent=11 // pred_fallthru
          _
        // Predicated region
        $region17: #{tpu_custom_call.1} parent=11 // pred_check
          %p389 = pneg %p93
        $region18: #{tpu_custom_call.1} parent=11 // pred_check_branch
          %391 = sbr.rel (%p389) target = $region20
        $region19: #{tpu_custom_call.1} parent=11 // pred_region
          _
        $region20: #{tpu_custom_call.1} parent=11 // pred_fallthru
          _
        // Predicated region
        $region21: #{tpu_custom_call.1} parent=11 // pred_check
          %p392 = pneg %p114
        $region22: #{tpu_custom_call.1} parent=11 // pred_check_branch
          %394 = sbr.rel (%p392) target = $region24
        $region23: #{tpu_custom_call.1} parent=11 // pred_region
          _
        $region24: #{tpu_custom_call.1} parent=11 // pred_fallthru
          _
        // Predicated region
        $region25: #{tpu_custom_call.1} parent=11 // pred_check
          %p395 = pneg %p135
        $region26: #{tpu_custom_call.1} parent=11 // pred_check_branch
          %397 = sbr.rel (%p395) target = $region28
        $region27: #{tpu_custom_call.1} parent=11 // pred_region
          _
        $region28: #{tpu_custom_call.1} parent=11 // pred_fallthru
          _
        // Predicated region
        $region29: #{tpu_custom_call.1} parent=11 // pred_check
          %p398 = pneg %p156
        $region30: #{tpu_custom_call.1} parent=11 // pred_check_branch
          %400 = sbr.rel (%p398) target = $region32
        $region31: #{tpu_custom_call.1} parent=11 // pred_region
          _
        $region32: #{tpu_custom_call.1} parent=11 // pred_fallthru
          _
        // Predicated region
        $region33: #{tpu_custom_call.1} parent=11 // pred_check
          %p401 = pneg %p177
        $region34: #{tpu_custom_call.1} parent=11 // pred_check_branch
          %403 = sbr.rel (%p401) target = $region36
        $region35: #{tpu_custom_call.1} parent=11 // pred_region
          _
        $region36: #{tpu_custom_call.1} parent=11 // pred_fallthru
          _
        // Predicated region
        $region37: #{tpu_custom_call.1} parent=11 // pred_check
          %p404 = pneg %p198
        $region38: #{tpu_custom_call.1} parent=11 // pred_check_branch
          %406 = sbr.rel (%p404) target = $region40
        $region39: #{tpu_custom_call.1} parent=11 // pred_region
          %s408 = ssub.s32 256, 256
          %409 = vsyncadd [#allocation3], %s408
          %s410 = sshll.u32 [#allocation2], 4
          %s411 = int_to_ptr.vmem [resolvable:$true] %s410
          %416 = dma.hbm_to_vmem [thread:$0]  %s7, 256, %s411, [#allocation3], 64, 64, 4
        $region40: #{tpu_custom_call.1} parent=11 // pred_fallthru
          _
        // Predicated region
        $region41: #{tpu_custom_call.1} parent=11 // pred_check
          %p417 = pneg %p219
        $region42: #{tpu_custom_call.1} parent=11 // pred_check_branch
          %419 = sbr.rel (%p417) target = $region44
        $region43: #{tpu_custom_call.1} parent=11 // pred_region
          _
        $region44: #{tpu_custom_call.1} parent=11 // pred_fallthru
          _
        // Predicated region
        $region45: #{tpu_custom_call.1} parent=11 // pred_check
          %p420 = pneg %p240
        $region46: #{tpu_custom_call.1} parent=11 // pred_check_branch
          %422 = sbr.rel (%p420) target = $region48
        $region47: #{tpu_custom_call.1} parent=11 // pred_region
          _
        $region48: #{tpu_custom_call.1} parent=11 // pred_fallthru
          _
        // Predicated region
        $region49: #{tpu_custom_call.1} parent=11 // pred_check
          %p423 = pneg %p261
        $region50: #{tpu_custom_call.1} parent=11 // pred_check_branch
          %425 = sbr.rel (%p423) target = $region52
        $region51: #{tpu_custom_call.1} parent=11 // pred_region
          _
        $region52: #{tpu_custom_call.1} parent=11 // pred_fallthru
          _
        // Predicated region
        $region53: #{tpu_custom_call.1} parent=11 // pred_check
          %p426 = pneg %p282
        $region54: #{tpu_custom_call.1} parent=11 // pred_check_branch
          %428 = sbr.rel (%p426) target = $region56
        $region55: #{tpu_custom_call.1} parent=11 // pred_region
          _
        $region56: #{tpu_custom_call.1} parent=11 // pred_fallthru
          _
        // Predicated region
        $region57: #{tpu_custom_call.1} parent=11 // pred_check
          %p429 = pneg %p303
        $region58: #{tpu_custom_call.1} parent=11 // pred_check_branch
          %431 = sbr.rel (%p429) target = $region60
        $region59: #{tpu_custom_call.1} parent=11 // pred_region
          _
        $region60: #{tpu_custom_call.1} parent=11 // pred_fallthru
          _
        // Predicated region
        $region61: #{tpu_custom_call.1} parent=11 // pred_check
          %p432 = pneg %p324
        $region62: #{tpu_custom_call.1} parent=11 // pred_check_branch
          %434 = sbr.rel (%p432) target = $region64
        $region63: #{tpu_custom_call.1} parent=11 // pred_region
          _
        $region64: #{tpu_custom_call.1} parent=11 // pred_fallthru
          _
        // Predicated region
        $region65: #{tpu_custom_call.1} parent=11 // pred_check
          %p435 = pneg %p345
        $region66: #{tpu_custom_call.1} parent=11 // pred_check_branch
          %437 = sbr.rel (%p435) target = $region68
        $region67: #{tpu_custom_call.1} parent=11 // pred_region
          _
        $region68: #{tpu_custom_call.1} parent=11 // pred_fallthru
          _
      $region12: #{tpu_custom_call.1} parent=5 // pred_fallthru
        _
      %p438 = scmp.lt.s32.totalorder %s25, 2
      // Predicated region
      $region69: #{tpu_custom_call.1} parent=5 // pred_check
        %p439 = pneg %p438
      $region70: #{tpu_custom_call.1} parent=5 // pred_check_branch
        %441 = sbr.rel (%p439) target = $region72
      $region71: #{tpu_custom_call.1} parent=5 // pred_region
        // Predicated region
        $region73: #{tpu_custom_call.1} parent=71 // pred_check
          %p442 = pneg %p45
        $region74: #{tpu_custom_call.1} parent=71 // pred_check_branch
          %444 = sbr.rel (%p442) target = $region76
        $region75: #{tpu_custom_call.1} parent=71 // pred_region
          %p445 = scmp.lt.s32.totalorder %s25, 1
          %s446 = scalar_select %p445, %s25, 1
          %s447 = smul.addr %s446, 8
          %s448 = scalar_lea.vmem %s0, %s447
        $region76: #{tpu_custom_call.1} parent=71 // pred_fallthru
          _
      $region72: #{tpu_custom_call.1} parent=5 // pred_fallthru
        _
      %p449 = scmp.le.s32.totalorder 1, %s25
      %p450 = scmp.lt.s32.totalorder %s25, 3
      %p451 = pnand %p449, %p450
      %p452 = pneg %p451
      // Predicated region
      $region77: #{tpu_custom_call.1} parent=5 // pred_check
        _
      $region78: #{tpu_custom_call.1} parent=5 // pred_check_branch
        %454 = sbr.rel (%p451) target = $region80
      $region79: #{tpu_custom_call.1} parent=5 // pred_region
        %s455 = ssub.s32 %s25, 1
        // Predicated region
        $region81: #{tpu_custom_call.1} parent=79 // pred_check
          %p456 = pneg %p198
        $region82: #{tpu_custom_call.1} parent=79 // pred_check_branch
          %458 = sbr.rel (%p456) target = $region84
        $region83: #{tpu_custom_call.1} parent=79 // pred_region
          %459 = dma.done [#allocation3], 256
        $region84: #{tpu_custom_call.1} parent=79 // pred_fallthru
          _
        %p460 = scmp.lt.s32.totalorder %s30, 1
        %s461 = scalar_select %p460, %s30, 1
        %s462 = smul.addr %s461, 8
        %s463 = scalar_lea.vmem %s0, %s462
        %p464 = pneg %p51
        %p465 = pneg %p48
        %p466 = pneg %p72
        %p467 = pneg %p69
        %p468 = pneg %p93
        %p469 = pneg %p90
        %p470 = pneg %p114
        %p471 = pneg %p111
        %p472 = pneg %p135
        %p473 = pneg %p132
        %p474 = pneg %p156
        %p475 = pneg %p153
        %p476 = pneg %p177
        %p477 = pneg %p174
        %p478 = pneg %p198
        %p479 = pneg %p195
        %p480 = pneg %p219
        %p481 = pneg %p216
        %p482 = pneg %p240
        %p483 = pneg %p237
        %p484 = pneg %p261
        %p485 = pneg %p258
        %p486 = pneg %p282
        %p487 = pneg %p279
        %p488 = pneg %p303
        %p489 = pneg %p300
        %p490 = pneg %p324
        %p491 = pneg %p321
        %p492 = pneg %p345
        %p493 = pneg %p342
        %p494 = pneg %p371
        %p495 = pneg %p368
        %s496 = sand.u32 %s358, 1
        %s497 = scalar_lea.sflag [#allocation4], %s496
        %s498 = sand.u32 %s358, 1
        %s499 = smul.addr %s498, 8
        %s500 = scalar_lea.vmem [#allocation5], %s499
        %p501 = scmp.lt.s32.totalorder %s30, 1
        %s502 = scalar_select %p501, %s30, 1
        %s503 = smul.addr %s502, 8
        %s504 = scalar_lea.vmem %s0, %s503
        %v506 = vld [vmem:[%s504] sm:$0xff]
        %v507 = vpack.c.bf16 %v506, %v506
        %v508 = vld [vmem:[%s1] sm:$0xf]
        %v509 = vld [vmem:[%s1 + $0x4] sm:$0xf]
        %v510 = vld [vmem:[%s1 + $0x8] sm:$0xf]
        %v511 = vld [vmem:[%s1 + $0xc] sm:$0xf]
        %v512 = vld [vmem:[%s2] sm:$0x1]
        %v514 = vlaneseq
        %v515 = vshrl.u32 %v514, 7
        %v516 = vsub.s32 0, %v515
        %v517 = vrot.slane %v512, %v516
        %v523 = vunpack.c.l.b16 %v508
        %v524 = vunpack.c.l.b16 %v509
        %v525 = vunpack.c.l.b16 %v510
        %v526 = vunpack.c.l.b16 %v511
        %v527 = vpack.c.b16 %v524, %v523
        %v528 = vpack.c.b16 %v526, %v525
        %vm531 = vcmask 261120
        %v533 = vsel %vm531, %v507, 0
        %535 = vmatprep.subr.bf16.mxu0 0
        %536 = vmatpush1.bf16.msra.mxu0 %v527
        %537 = vmatprep.subr.bf16.mxu0 0
        %538 = vmatpush1.bf16.msra.mxu0 %v528
        %539 = vmatprep.subr.bf16.mxu0 0
        %540 = vmatpush1.bf16.msra.mxu0 0
        %541 = vmatprep.subr.bf16.mxu0 0
        %542 = vmatpush1.bf16.msra.mxu0 0
        %543 = vmatprep.subr.bf16.mxu0 0
        %544 = vmatpush1.bf16.msra.mxu0 0
        %545 = vmatprep.subr.bf16.mxu0 0
        %546 = vmatpush1.bf16.msra.mxu0 0
        %547 = vmatprep.subr.bf16.mxu0 0
        %548 = vmatpush1.bf16.msra.mxu0 0
        %549 = vmatprep.subr.bf16.mxu0 0
        %550 = vmatpush1.bf16.msra.mxu0 0
        %551 = vmatprep.subr.bf16.mxu0 0
        %552 = vmatpush1.bf16.msra.mxu0 0
        %553 = vmatprep.subr.bf16.mxu0 0
        %554 = vmatpush1.bf16.msra.mxu0 0
        %555 = vmatprep.subr.bf16.mxu0 0
        %556 = vmatpush1.bf16.msra.mxu0 0
        %557 = vmatprep.subr.bf16.mxu0 0
        %558 = vmatpush1.bf16.msra.mxu0 0
        %559 = vmatprep.subr.bf16.mxu0 0
        %560 = vmatpush1.bf16.msra.mxu0 0
        %561 = vmatprep.subr.bf16.mxu0 0
        %562 = vmatpush1.bf16.msra.mxu0 0
        %563 = vmatprep.subr.bf16.mxu0 0
        %564 = vmatpush1.bf16.msra.mxu0 0
        %565 = vmatprep.subr.bf16.mxu0 0
        %566 = vmatpush1.bf16.msra.mxu0 0
        %567 = vmatprep.mubr.bf16.mxu0 0
        %568 = vmatmul.mubr.bf16.gmra.mrb[0].mxu0 %v533
        %v569 = vpop.f32.mrb[0].mxu0
        %v570 = vadd.f32 %v517, %v569
        %v571 = vpop.f32.mrb[0].mxu0
        %v572 = vpop.f32.mrb[0].mxu0
        %v573 = vpop.f32.mrb[0].mxu0
        %574 = vdwg.mxu0
        %v575 = vmul.f32 %v570, 0.35355338
        %577 = vrot.lane.b32.xlu0 %v575, 120
        %v578 = vpop.permute.xlu0 %577
        %580 = vrot.lane.b32.xlu0 %v575, 112
        %v581 = vpop.permute.xlu0 %580
        %583 = vrot.lane.b32.xlu0 %v575, 104
        %v584 = vpop.permute.xlu0 %583
        %v586 = vcombine.low %v575, %v581
        %v587 = vcombine.high %v575, %v581
        %v589 = vunpack.c.l.s4 1983009808
        %v590 = vunpack.c.0.s8 %v589
        %v591 = vlaneseq
        %v592 = vshrl.u32 %v591, 7
        %v593 = vsub.s32 %v590, %v592
        %v594 = vrot.slane %v586, %v593
        %v596 = vunpack.c.l.s4 1983009808
        %v597 = vunpack.c.0.s8 %v596
        %v598 = vlaneseq
        %v599 = vshrl.u32 %v598, 7
        %v600 = vsub.s32 %v597, %v599
        %v601 = vrot.slane %v587, %v600
        %v602 = vcombine.low %v578, %v584
        %v603 = vcombine.high %v578, %v584
        %v605 = vunpack.c.l.s4 1983009808
        %v606 = vunpack.c.0.s8 %v605
        %v607 = vlaneseq
        %v608 = vshrl.u32 %v607, 7
        %v609 = vsub.s32 %v606, %v608
        %v610 = vrot.slane %v602, %v609
        %v612 = vunpack.c.l.s4 1983009808
        %v613 = vunpack.c.0.s8 %v612
        %v614 = vlaneseq
        %v615 = vshrl.u32 %v614, 7
        %v616 = vsub.s32 %v613, %v615
        %v617 = vrot.slane %v603, %v616
        %v618 = vcombine.low %v594, %v610
        %v619 = vcombine.high %v594, %v610
        %v621 = vunpack.c.l.s4 1934713408
        %v622 = vunpack.c.0.s8 %v621
        %v623 = vlaneseq
        %v624 = vshrl.u32 %v623, 7
        %v625 = vsub.s32 %v622, %v624
        %v626 = vrot.slane %v618, %v625
        %v628 = vunpack.c.l.s4 1934713408
        %v629 = vunpack.c.0.s8 %v628
        %v630 = vlaneseq
        %v631 = vshrl.u32 %v630, 7
        %v632 = vsub.s32 %v629, %v631
        %v633 = vrot.slane %v619, %v632
        %v634 = vcombine.low %v601, %v617
        %v635 = vcombine.high %v601, %v617
        %v637 = vunpack.c.l.s4 1934713408
        %v638 = vunpack.c.0.s8 %v637
        %v639 = vlaneseq
        %v640 = vshrl.u32 %v639, 7
        %v641 = vsub.s32 %v638, %v640
        %v642 = vrot.slane %v634, %v641
        %v644 = vunpack.c.l.s4 1934713408
        %v645 = vunpack.c.0.s8 %v644
        %v646 = vlaneseq
        %v647 = vshrl.u32 %v646, 7
        %v648 = vsub.s32 %v645, %v647
        %v649 = vrot.slane %v635, %v648
        %v650 = vcombine.high %v626, 0.0
        %v651 = vcombine.high %v633, 0.0
        %v652 = vcombine.high %v642, 0.0
        %v653 = vcombine.high %v649, 0.0
        %v654 = vcombine.low %v626, %v633
        %v656 = vunpack.c.l.s4 1983009808
        %v657 = vunpack.c.0.s8 %v656
        %v658 = vlaneseq
        %v659 = vshrl.u32 %v658, 7
        %v660 = vsub.s32 %v657, %v659
        %v661 = vrot.slane %v654, %v660
        %v662 = vcombine.low %v650, %v651
        %v664 = vunpack.c.l.s4 1983009808
        %v665 = vunpack.c.0.s8 %v664
        %v666 = vlaneseq
        %v667 = vshrl.u32 %v666, 7
        %v668 = vsub.s32 %v665, %v667
        %v669 = vrot.slane %v662, %v668
        %v670 = vcombine.low %v642, %v649
        %v672 = vunpack.c.l.s4 1983009808
        %v673 = vunpack.c.0.s8 %v672
        %v674 = vlaneseq
        %v675 = vshrl.u32 %v674, 7
        %v676 = vsub.s32 %v673, %v675
        %v677 = vrot.slane %v670, %v676
        %v678 = vcombine.low %v652, %v653
        %v680 = vunpack.c.l.s4 1983009808
        %v681 = vunpack.c.0.s8 %v680
        %v682 = vlaneseq
        %v683 = vshrl.u32 %v682, 7
        %v684 = vsub.s32 %v681, %v683
        %v685 = vrot.slane %v678, %v684
        %v686 = vcombine.low %v661, %v669
        %v687 = vcombine.high %v661, %v669
        %v689 = vunpack.c.l.s4 1934713408
        %v690 = vunpack.c.0.s8 %v689
        %v691 = vlaneseq
        %v692 = vshrl.u32 %v691, 7
        %v693 = vsub.s32 %v690, %v692
        %v694 = vrot.slane %v686, %v693
        %v696 = vunpack.c.l.s4 1934713408
        %v697 = vunpack.c.0.s8 %v696
        %v698 = vlaneseq
        %v699 = vshrl.u32 %v698, 7
        %v700 = vsub.s32 %v697, %v699
        %v701 = vrot.slane %v687, %v700
        %v702 = vcombine.low %v677, %v685
        %v703 = vcombine.high %v677, %v685
        %v705 = vunpack.c.l.s4 1934713408
        %v706 = vunpack.c.0.s8 %v705
        %v707 = vlaneseq
        %v708 = vshrl.u32 %v707, 7
        %v709 = vsub.s32 %v706, %v708
        %v710 = vrot.slane %v702, %v709
        %v712 = vunpack.c.l.s4 1934713408
        %v713 = vunpack.c.0.s8 %v712
        %v714 = vlaneseq
        %v715 = vshrl.u32 %v714, 7
        %v716 = vsub.s32 %v713, %v715
        %v717 = vrot.slane %v703, %v716
        %v718 = vcombine.low %v694, %v710
        %v719 = vcombine.high %v694, %v710
        %v720 = vcombine.low %v701, %v717
        %v721 = vcombine.high %v701, %v717
        %v722 = vpack.c.bf16 %v718, %v718
        %v723 = vpack.c.bf16 %v719, %v719
        %v724 = vpack.c.bf16 %v720, %v720
        %v725 = vpack.c.bf16 %v721, %v721
        %727 = vrot.lane.b32.xlu0 %v570, 120
        %v728 = vpop.permute.xlu0 %727
        %729 = vrot.lane.b32.xlu0 %v570, 112
        %v730 = vpop.permute.xlu0 %729
        %731 = vrot.lane.b32.xlu0 %v570, 104
        %v732 = vpop.permute.xlu0 %731
        %733 = vrot.lane.b32.xlu0 %v570, 96
        %v734 = vpop.permute.xlu0 %733
        %735 = vrot.lane.b32.xlu0 %v728, 96
        %v736 = vpop.permute.xlu0 %735
        %737 = vrot.lane.b32.xlu0 %v730, 96
        %v738 = vpop.permute.xlu0 %737
        %739 = vrot.lane.b32.xlu0 %v732, 96
        %v740 = vpop.permute.xlu0 %739
        %v745 = vcombine.low %v734, %v738
        %v746 = vcombine.high %v734, %v738
        %v748 = vunpack.c.l.s4 1983009808
        %v749 = vunpack.c.0.s8 %v748
        %v750 = vlaneseq
        %v751 = vshrl.u32 %v750, 7
        %v752 = vsub.s32 %v749, %v751
        %v753 = vrot.slane %v745, %v752
        %v755 = vunpack.c.l.s4 1983009808
        %v756 = vunpack.c.0.s8 %v755
        %v757 = vlaneseq
        %v758 = vshrl.u32 %v757, 7
        %v759 = vsub.s32 %v756, %v758
        %v760 = vrot.slane %v746, %v759
        %v761 = vcombine.low %v736, %v740
        %v762 = vcombine.high %v736, %v740
        %v764 = vunpack.c.l.s4 1983009808
        %v765 = vunpack.c.0.s8 %v764
        %v766 = vlaneseq
        %v767 = vshrl.u32 %v766, 7
        %v768 = vsub.s32 %v765, %v767
        %v769 = vrot.slane %v761, %v768
        %v771 = vunpack.c.l.s4 1983009808
        %v772 = vunpack.c.0.s8 %v771
        %v773 = vlaneseq
        %v774 = vshrl.u32 %v773, 7
        %v775 = vsub.s32 %v772, %v774
        %v776 = vrot.slane %v762, %v775
        %v777 = vcombine.low %v753, %v769
        %v778 = vcombine.high %v753, %v769
        %v780 = vunpack.c.l.s4 1934713408
        %v781 = vunpack.c.0.s8 %v780
        %v782 = vlaneseq
        %v783 = vshrl.u32 %v782, 7
        %v784 = vsub.s32 %v781, %v783
        %v785 = vrot.slane %v777, %v784
        %v787 = vunpack.c.l.s4 1934713408
        %v788 = vunpack.c.0.s8 %v787
        %v789 = vlaneseq
        %v790 = vshrl.u32 %v789, 7
        %v791 = vsub.s32 %v788, %v790
        %v792 = vrot.slane %v778, %v791
        %v793 = vcombine.low %v760, %v776
        %v794 = vcombine.high %v760, %v776
        %v796 = vunpack.c.l.s4 1934713408
        %v797 = vunpack.c.0.s8 %v796
        %v798 = vlaneseq
        %v799 = vshrl.u32 %v798, 7
        %v800 = vsub.s32 %v797, %v799
        %v801 = vrot.slane %v793, %v800
        %v803 = vunpack.c.l.s4 1934713408
        %v804 = vunpack.c.0.s8 %v803
        %v805 = vlaneseq
        %v806 = vshrl.u32 %v805, 7
        %v807 = vsub.s32 %v804, %v806
        %v808 = vrot.slane %v794, %v807
        %v809 = vcombine.high %v785, 0.0
        %v810 = vcombine.high %v792, 0.0
        %v811 = vcombine.high %v801, 0.0
        %v812 = vcombine.high %v808, 0.0
        %v813 = vcombine.low %v785, %v792
        %v815 = vunpack.c.l.s4 1983009808
        %v816 = vunpack.c.0.s8 %v815
        %v817 = vlaneseq
        %v818 = vshrl.u32 %v817, 7
        %v819 = vsub.s32 %v816, %v818
        %v820 = vrot.slane %v813, %v819
        %v821 = vcombine.low %v809, %v810
        %v823 = vunpack.c.l.s4 1983009808
        %v824 = vunpack.c.0.s8 %v823
        %v825 = vlaneseq
        %v826 = vshrl.u32 %v825, 7
        %v827 = vsub.s32 %v824, %v826
        %v828 = vrot.slane %v821, %v827
        %v829 = vcombine.low %v801, %v808
        %v831 = vunpack.c.l.s4 1983009808
        %v832 = vunpack.c.0.s8 %v831
        %v833 = vlaneseq
        %v834 = vshrl.u32 %v833, 7
        %v835 = vsub.s32 %v832, %v834
        %v836 = vrot.slane %v829, %v835
        %v837 = vcombine.low %v811, %v812
        %v839 = vunpack.c.l.s4 1983009808
        %v840 = vunpack.c.0.s8 %v839
        %v841 = vlaneseq
        %v842 = vshrl.u32 %v841, 7
        %v843 = vsub.s32 %v840, %v842
        %v844 = vrot.slane %v837, %v843
        %v845 = vcombine.low %v820, %v828
        %v846 = vcombine.high %v820, %v828
        %v848 = vunpack.c.l.s4 1934713408
        %v849 = vunpack.c.0.s8 %v848
        %v850 = vlaneseq
        %v851 = vshrl.u32 %v850, 7
        %v852 = vsub.s32 %v849, %v851
        %v853 = vrot.slane %v845, %v852
        %v855 = vunpack.c.l.s4 1934713408
        %v856 = vunpack.c.0.s8 %v855
        %v857 = vlaneseq
        %v858 = vshrl.u32 %v857, 7
        %v859 = vsub.s32 %v856, %v858
        %v860 = vrot.slane %v846, %v859
        %v861 = vcombine.low %v836, %v844
        %v862 = vcombine.high %v836, %v844
        %v864 = vunpack.c.l.s4 1934713408
        %v865 = vunpack.c.0.s8 %v864
        %v866 = vlaneseq
        %v867 = vshrl.u32 %v866, 7
        %v868 = vsub.s32 %v865, %v867
        %v869 = vrot.slane %v861, %v868
        %v871 = vunpack.c.l.s4 1934713408
        %v872 = vunpack.c.0.s8 %v871
        %v873 = vlaneseq
        %v874 = vshrl.u32 %v873, 7
        %v875 = vsub.s32 %v872, %v874
        %v876 = vrot.slane %v862, %v875
        %v877 = vcombine.low %v853, %v869
        %v878 = vcombine.high %v853, %v869
        %v879 = vcombine.low %v860, %v876
        %v880 = vcombine.high %v860, %v876
        %v881 = vpack.c.bf16 %v877, %v877
        %v882 = vpack.c.bf16 %v878, %v878
        %v883 = vpack.c.bf16 %v879, %v879
        %v884 = vpack.c.bf16 %v880, %v880
        %885 = vrot.lane.b32.xlu0 %v570, 64
        %v886 = vpop.permute.xlu0 %885
        %887 = vrot.lane.b32.xlu0 %v728, 64
        %v888 = vpop.permute.xlu0 %887
        %889 = vrot.lane.b32.xlu0 %v730, 64
        %v890 = vpop.permute.xlu0 %889
        %891 = vrot.lane.b32.xlu0 %v732, 64
        %v892 = vpop.permute.xlu0 %891
        %v897 = vcombine.low %v886, %v890
        %v898 = vcombine.high %v886, %v890
        %v900 = vunpack.c.l.s4 1983009808
        %v901 = vunpack.c.0.s8 %v900
        %v902 = vlaneseq
        %v903 = vshrl.u32 %v902, 7
        %v904 = vsub.s32 %v901, %v903
        %v905 = vrot.slane %v897, %v904
        %v907 = vunpack.c.l.s4 1983009808
        %v908 = vunpack.c.0.s8 %v907
        %v909 = vlaneseq
        %v910 = vshrl.u32 %v909, 7
        %v911 = vsub.s32 %v908, %v910
        %v912 = vrot.slane %v898, %v911
        %v913 = vcombine.low %v888, %v892
        %v914 = vcombine.high %v888, %v892
        %v916 = vunpack.c.l.s4 1983009808
        %v917 = vunpack.c.0.s8 %v916
        %v918 = vlaneseq
        %v919 = vshrl.u32 %v918, 7
        %v920 = vsub.s32 %v917, %v919
        %v921 = vrot.slane %v913, %v920
        %v923 = vunpack.c.l.s4 1983009808
        %v924 = vunpack.c.0.s8 %v923
        %v925 = vlaneseq
        %v926 = vshrl.u32 %v925, 7
        %v927 = vsub.s32 %v924, %v926
        %v928 = vrot.slane %v914, %v927
        %v929 = vcombine.low %v905, %v921
        %v930 = vcombine.high %v905, %v921
        %v932 = vunpack.c.l.s4 1934713408
        %v933 = vunpack.c.0.s8 %v932
        %v934 = vlaneseq
        %v935 = vshrl.u32 %v934, 7
        %v936 = vsub.s32 %v933, %v935
        %v937 = vrot.slane %v929, %v936
        %v939 = vunpack.c.l.s4 1934713408
        %v940 = vunpack.c.0.s8 %v939
        %v941 = vlaneseq
        %v942 = vshrl.u32 %v941, 7
        %v943 = vsub.s32 %v940, %v942
        %v944 = vrot.slane %v930, %v943
        %v945 = vcombine.low %v912, %v928
        %v946 = vcombine.high %v912, %v928
        %v948 = vunpack.c.l.s4 1934713408
        %v949 = vunpack.c.0.s8 %v948
        %v950 = vlaneseq
        %v951 = vshrl.u32 %v950, 7
        %v952 = vsub.s32 %v949, %v951
        %v953 = vrot.slane %v945, %v952
        %v955 = vunpack.c.l.s4 1934713408
        %v956 = vunpack.c.0.s8 %v955
        %v957 = vlaneseq
        %v958 = vshrl.u32 %v957, 7
        %v959 = vsub.s32 %v956, %v958
        %v960 = vrot.slane %v946, %v959
        %v961 = vcombine.high %v937, 0.0
        %v962 = vcombine.high %v944, 0.0
        %v963 = vcombine.high %v953, 0.0
        %v964 = vcombine.high %v960, 0.0
        %v965 = vcombine.low %v937, %v944
        %v967 = vunpack.c.l.s4 1983009808
        %v968 = vunpack.c.0.s8 %v967
        %v969 = vlaneseq
        %v970 = vshrl.u32 %v969, 7
        %v971 = vsub.s32 %v968, %v970
        %v972 = vrot.slane %v965, %v971
        %v973 = vcombine.low %v961, %v962
        %v975 = vunpack.c.l.s4 1983009808
        %v976 = vunpack.c.0.s8 %v975
        %v977 = vlaneseq
        %v978 = vshrl.u32 %v977, 7
        %v979 = vsub.s32 %v976, %v978
        %v980 = vrot.slane %v973, %v979
        %v981 = vcombine.low %v953, %v960
        %v983 = vunpack.c.l.s4 1983009808
        %v984 = vunpack.c.0.s8 %v983
        %v985 = vlaneseq
        %v986 = vshrl.u32 %v985, 7
        %v987 = vsub.s32 %v984, %v986
        %v988 = vrot.slane %v981, %v987
        %v989 = vcombine.low %v963, %v964
        %v991 = vunpack.c.l.s4 1983009808
        %v992 = vunpack.c.0.s8 %v991
        %v993 = vlaneseq
        %v994 = vshrl.u32 %v993, 7
        %v995 = vsub.s32 %v992, %v994
        %v996 = vrot.slane %v989, %v995
        %v997 = vcombine.low %v972, %v980
        %v998 = vcombine.high %v972, %v980
        %v1000 = vunpack.c.l.s4 1934713408
        %v1001 = vunpack.c.0.s8 %v1000
        %v1002 = vlaneseq
        %v1003 = vshrl.u32 %v1002, 7
        %v1004 = vsub.s32 %v1001, %v1003
        %v1005 = vrot.slane %v997, %v1004
        %v1007 = vunpack.c.l.s4 1934713408
        %v1008 = vunpack.c.0.s8 %v1007
        %v1009 = vlaneseq
        %v1010 = vshrl.u32 %v1009, 7
        %v1011 = vsub.s32 %v1008, %v1010
        %v1012 = vrot.slane %v998, %v1011
        %v1013 = vcombine.low %v988, %v996
        %v1014 = vcombine.high %v988, %v996
        %v1016 = vunpack.c.l.s4 1934713408
        %v1017 = vunpack.c.0.s8 %v1016
        %v1018 = vlaneseq
        %v1019 = vshrl.u32 %v1018, 7
        %v1020 = vsub.s32 %v1017, %v1019
        %v1021 = vrot.slane %v1013, %v1020
        %v1023 = vunpack.c.l.s4 1934713408
        %v1024 = vunpack.c.0.s8 %v1023
        %v1025 = vlaneseq
        %v1026 = vshrl.u32 %v1025, 7
        %v1027 = vsub.s32 %v1024, %v1026
        %v1028 = vrot.slane %v1014, %v1027
        %v1029 = vcombine.low %v1005, %v1021
        %v1030 = vcombine.high %v1005, %v1021
        %v1031 = vcombine.low %v1012, %v1028
        %v1032 = vcombine.high %v1012, %v1028
        %v1033 = vpack.c.bf16 %v1029, %v1029
        %v1034 = vpack.c.bf16 %v1030, %v1030
        %v1035 = vpack.c.bf16 %v1031, %v1031
        %v1036 = vpack.c.bf16 %v1032, %v1032
        %vm1037 = vcmask 64512
        %v1039 = vsel %vm1037, %v722, 0
        %v1042 = vsel %vm1037, %v881, 0
        %1044 = vmatprep.subr.bf16.mxu0 0
        %1045 = vmatpush1.bf16.xpose.msra.mxu0 %v1042
        %1046 = vmatprep.subr.bf16.mxu0 0
        %1047 = vmatpush1.bf16.xpose.msra.mxu0 0
        %1048 = vmatprep.subr.bf16.mxu0 0
        %1049 = vmatpush1.bf16.xpose.msra.mxu0 0
        %1050 = vmatprep.subr.bf16.mxu0 0
        %1051 = vmatpush1.bf16.xpose.msra.mxu0 0
        %1052 = vmatprep.subr.bf16.mxu0 0
        %1053 = vmatpush1.bf16.xpose.msra.mxu0 0
        %1054 = vmatprep.subr.bf16.mxu0 0
        %1055 = vmatpush1.bf16.xpose.msra.mxu0 0
        %1056 = vmatprep.subr.bf16.mxu0 0
        %1057 = vmatpush1.bf16.xpose.msra.mxu0 0
        %1058 = vmatprep.subr.bf16.mxu0 0
        %1059 = vmatpush1.bf16.xpose.msra.mxu0 0
        %1060 = vmatprep.subr.bf16.mxu0 0
        %1061 = vmatpush1.bf16.xpose.msra.mxu0 0
        %1062 = vmatprep.subr.bf16.mxu0 0
        %1063 = vmatpush1.bf16.xpose.msra.mxu0 0
        %1064 = vmatprep.subr.bf16.mxu0 0
        %1065 = vmatpush1.bf16.xpose.msra.mxu0 0
        %1066 = vmatprep.subr.bf16.mxu0 0
        %1067 = vmatpush1.bf16.xpose.msra.mxu0 0
        %1068 = vmatprep.subr.bf16.mxu0 0
        %1069 = vmatpush1.bf16.xpose.msra.mxu0 0
        %1070 = vmatprep.subr.bf16.mxu0 0
        %1071 = vmatpush1.bf16.xpose.msra.mxu0 0
        %1072 = vmatprep.subr.bf16.mxu0 0
        %1073 = vmatpush1.bf16.xpose.msra.mxu0 0
        %1074 = vmatprep.subr.bf16.mxu0 0
        %1075 = vmatpush1.bf16.xpose.msra.mxu0 0
        %1076 = vmatprep.mubr.bf16.mxu0 0
        %1077 = vmatmul.mubr.bf16.gmra.mrb[0].mxu0 %v1039
        %v1078 = vpop.f32.mrb[0].mxu0
        %v1079 = vadd.f32 0.0, %v1078
        %v1080 = vpop.f32.mrb[0].mxu0
        %v1081 = vpop.f32.mrb[0].mxu0
        %v1082 = vpop.f32.mrb[0].mxu0
        %1083 = vdwg.mxu0
        %v1085 = vsel %vm1037, %v723, 0
        %v1088 = vsel %vm1037, %v882, 0
        %1090 = vmatprep.subr.bf16.mxu0 0
        %1091 = vmatpush1.bf16.xpose.msra.mxu0 %v1088
        %1092 = vmatprep.subr.bf16.mxu0 0
        %1093 = vmatpush1.bf16.xpose.msra.mxu0 0
        %1094 = vmatprep.subr.bf16.mxu0 0
        %1095 = vmatpush1.bf16.xpose.msra.mxu0 0
        %1096 = vmatprep.subr.bf16.mxu0 0
        %1097 = vmatpush1.bf16.xpose.msra.mxu0 0
        %1098 = vmatprep.subr.bf16.mxu0 0
        %1099 = vmatpush1.bf16.xpose.msra.mxu0 0
        %1100 = vmatprep.subr.bf16.mxu0 0
        %1101 = vmatpush1.bf16.xpose.msra.mxu0 0
        %1102 = vmatprep.subr.bf16.mxu0 0
        %1103 = vmatpush1.bf16.xpose.msra.mxu0 0
        %1104 = vmatprep.subr.bf16.mxu0 0
        %1105 = vmatpush1.bf16.xpose.msra.mxu0 0
        %1106 = vmatprep.subr.bf16.mxu0 0
        %1107 = vmatpush1.bf16.xpose.msra.mxu0 0
        %1108 = vmatprep.subr.bf16.mxu0 0
        %1109 = vmatpush1.bf16.xpose.msra.mxu0 0
        %1110 = vmatprep.subr.bf16.mxu0 0
        %1111 = vmatpush1.bf16.xpose.msra.mxu0 0
        %1112 = vmatprep.subr.bf16.mxu0 0
        %1113 = vmatpush1.bf16.xpose.msra.mxu0 0
        %1114 = vmatprep.subr.bf16.mxu0 0
        %1115 = vmatpush1.bf16.xpose.msra.mxu0 0
        %1116 = vmatprep.subr.bf16.mxu0 0
        %1117 = vmatpush1.bf16.xpose.msra.mxu0 0
        %1118 = vmatprep.subr.bf16.mxu0 0
        %1119 = vmatpush1.bf16.xpose.msra.mxu0 0
        %1120 = vmatprep.subr.bf16.mxu0 0
        %1121 = vmatpush1.bf16.xpose.msra.mxu0 0
        %1122 = vmatprep.mubr.bf16.mxu0 0
        %1123 = vmatmul.mubr.bf16.gmra.mrb[0].mxu0 %v1085
        %v1124 = vpop.f32.mrb[0].mxu0
        %v1125 = vadd.f32 0.0, %v1124
        %v1126 = vpop.f32.mrb[0].mxu0
        %v1127 = vpop.f32.mrb[0].mxu0
        %v1128 = vpop.f32.mrb[0].mxu0
        %1129 = vdwg.mxu0
        %v1131 = vsel %vm1037, %v724, 0
        %v1134 = vsel %vm1037, %v883, 0
        %1136 = vmatprep.subr.bf16.mxu0 0
        %1137 = vmatpush1.bf16.xpose.msra.mxu0 %v1134
        %1138 = vmatprep.subr.bf16.mxu0 0
        %1139 = vmatpush1.bf16.xpose.msra.mxu0 0
        %1140 = vmatprep.subr.bf16.mxu0 0
        %1141 = vmatpush1.bf16.xpose.msra.mxu0 0
        %1142 = vmatprep.subr.bf16.mxu0 0
        %1143 = vmatpush1.bf16.xpose.msra.mxu0 0
        %1144 = vmatprep.subr.bf16.mxu0 0
        %1145 = vmatpush1.bf16.xpose.msra.mxu0 0
        %1146 = vmatprep.subr.bf16.mxu0 0
        %1147 = vmatpush1.bf16.xpose.msra.mxu0 0
        %1148 = vmatprep.subr.bf16.mxu0 0
        %1149 = vmatpush1.bf16.xpose.msra.mxu0 0
        %1150 = vmatprep.subr.bf16.mxu0 0
        %1151 = vmatpush1.bf16.xpose.msra.mxu0 0
        %1152 = vmatprep.subr.bf16.mxu0 0
        %1153 = vmatpush1.bf16.xpose.msra.mxu0 0
        %1154 = vmatprep.subr.bf16.mxu0 0
        %1155 = vmatpush1.bf16.xpose.msra.mxu0 0
        %1156 = vmatprep.subr.bf16.mxu0 0
        %1157 = vmatpush1.bf16.xpose.msra.mxu0 0
        %1158 = vmatprep.subr.bf16.mxu0 0
        %1159 = vmatpush1.bf16.xpose.msra.mxu0 0
        %1160 = vmatprep.subr.bf16.mxu0 0
        %1161 = vmatpush1.bf16.xpose.msra.mxu0 0
        %1162 = vmatprep.subr.bf16.mxu0 0
        %1163 = vmatpush1.bf16.xpose.msra.mxu0 0
        %1164 = vmatprep.subr.bf16.mxu0 0
        %1165 = vmatpush1.bf16.xpose.msra.mxu0 0
        %1166 = vmatprep.subr.bf16.mxu0 0
        %1167 = vmatpush1.bf16.xpose.msra.mxu0 0
        %1168 = vmatprep.mubr.bf16.mxu0 0
        %1169 = vmatmul.mubr.bf16.gmra.mrb[0].mxu0 %v1131
        %v1170 = vpop.f32.mrb[0].mxu0
        %v1171 = vadd.f32 0.0, %v1170
        %v1172 = vpop.f32.mrb[0].mxu0
        %v1173 = vpop.f32.mrb[0].mxu0
        %v1174 = vpop.f32.mrb[0].mxu0
        %1175 = vdwg.mxu0
        %v1177 = vsel %vm1037, %v725, 0
        %v1180 = vsel %vm1037, %v884, 0
        %1182 = vmatprep.subr.bf16.mxu0 0
        %1183 = vmatpush1.bf16.xpose.msra.mxu0 %v1180
        %1184 = vmatprep.subr.bf16.mxu0 0
        %1185 = vmatpush1.bf16.xpose.msra.mxu0 0
        %1186 = vmatprep.subr.bf16.mxu0 0
        %1187 = vmatpush1.bf16.xpose.msra.mxu0 0
        %1188 = vmatprep.subr.bf16.mxu0 0
        %1189 = vmatpush1.bf16.xpose.msra.mxu0 0
        %1190 = vmatprep.subr.bf16.mxu0 0
        %1191 = vmatpush1.bf16.xpose.msra.mxu0 0
        %1192 = vmatprep.subr.bf16.mxu0 0
        %1193 = vmatpush1.bf16.xpose.msra.mxu0 0
        %1194 = vmatprep.subr.bf16.mxu0 0
        %1195 = vmatpush1.bf16.xpose.msra.mxu0 0
        %1196 = vmatprep.subr.bf16.mxu0 0
        %1197 = vmatpush1.bf16.xpose.msra.mxu0 0
        %1198 = vmatprep.subr.bf16.mxu0 0
        %1199 = vmatpush1.bf16.xpose.msra.mxu0 0
        %1200 = vmatprep.subr.bf16.mxu0 0
        %1201 = vmatpush1.bf16.xpose.msra.mxu0 0
        %1202 = vmatprep.subr.bf16.mxu0 0
        %1203 = vmatpush1.bf16.xpose.msra.mxu0 0
        %1204 = vmatprep.subr.bf16.mxu0 0
        %1205 = vmatpush1.bf16.xpose.msra.mxu0 0
        %1206 = vmatprep.subr.bf16.mxu0 0
        %1207 = vmatpush1.bf16.xpose.msra.mxu0 0
        %1208 = vmatprep.subr.bf16.mxu0 0
        %1209 = vmatpush1.bf16.xpose.msra.mxu0 0
        %1210 = vmatprep.subr.bf16.mxu0 0
        %1211 = vmatpush1.bf16.xpose.msra.mxu0 0
        %1212 = vmatprep.subr.bf16.mxu0 0
        %1213 = vmatpush1.bf16.xpose.msra.mxu0 0
        %1214 = vmatprep.mubr.bf16.mxu0 0
        %1215 = vmatmul.mubr.bf16.gmra.mrb[0].mxu0 %v1177
        %v1216 = vpop.f32.mrb[0].mxu0
        %v1217 = vadd.f32 0.0, %v1216
        %v1218 = vpop.f32.mrb[0].mxu0
        %v1219 = vpop.f32.mrb[0].mxu0
        %v1220 = vpop.f32.mrb[0].mxu0
        %1221 = vdwg.mxu0
        %v1222 = vsel %vm1037, %v1079, -inf
        %1223 = vmax.xlane.f32.xlu0 %v1222
        %v1224 = vpop.xlane.xlu0 %1223
        %v1225 = vsel %vm1037, %v1125, -inf
        %1226 = vmax.xlane.f32.xlu0 %v1225
        %v1227 = vpop.xlane.xlu0 %1226
        %v1228 = vsel %vm1037, %v1171, -inf
        %1229 = vmax.xlane.f32.xlu0 %v1228
        %v1230 = vpop.xlane.xlu0 %1229
        %v1231 = vsel %vm1037, %v1217, -inf
        %1232 = vmax.xlane.f32.xlu0 %v1231
        %v1233 = vpop.xlane.xlu0 %1232
        %v1234 = vsub.f32 %v1079, %v1224
        %v1235 = vsub.f32 %v1125, %v1227
        %v1236 = vsub.f32 %v1171, %v1230
        %v1237 = vsub.f32 %v1217, %v1233
        %v1238 = vmul.f32 %v1234, 1.442695
        %v1239 = vpow.pop %v1238
        %v1240 = vmul.f32 %v1235, 1.442695
        %v1241 = vpow.pop %v1240
        %v1242 = vmul.f32 %v1236, 1.442695
        %v1243 = vpow.pop %v1242
        %v1244 = vmul.f32 %v1237, 1.442695
        %v1245 = vpow.pop %v1244
        %v1246 = vsel %vm1037, %v1239, 0.0
        %1247 = vadd.xlane.f32.xlu0 %v1246
        %v1248 = vpop.xlane.xlu0 %1247
        %v1249 = vsel %vm1037, %v1241, 0.0
        %1250 = vadd.xlane.f32.xlu0 %v1249
        %v1251 = vpop.xlane.xlu0 %1250
        %v1252 = vsel %vm1037, %v1243, 0.0
        %1253 = vadd.xlane.f32.xlu0 %v1252
        %v1254 = vpop.xlane.xlu0 %1253
        %v1255 = vsel %vm1037, %v1245, 0.0
        %1256 = vadd.xlane.f32.xlu0 %v1255
        %v1257 = vpop.xlane.xlu0 %1256
        %v1258 = vrcp.pop %v1248
        %v1259 = vrcp.pop %v1251
        %v1260 = vrcp.pop %v1254
        %v1261 = vrcp.pop %v1257
        %v1262 = vmul.f32 %v1239, %v1258
        %v1263 = vmul.f32 %v1241, %v1259
        %v1264 = vmul.f32 %v1243, %v1260
        %v1265 = vmul.f32 %v1245, %v1261
        %v1266 = vpack.c.bf16 %v1262, %v1262
        %v1267 = vpack.c.bf16 %v1263, %v1263
        %v1268 = vpack.c.bf16 %v1264, %v1264
        %v1269 = vpack.c.bf16 %v1265, %v1265
        %v1271 = vsel %vm1037, %v1266, 0
        %vm1273 = vcmask 1043456
        %v1275 = vsel %vm1273, %v1033, 0
        %1277 = vmatprep.subr.bf16.mxu0 0
        %1278 = vmatpush1.bf16.msra.mxu0 %v1275
        %1279 = vmatprep.subr.bf16.mxu0 0
        %1280 = vmatpush1.bf16.msra.mxu0 0
        %1281 = vmatprep.subr.bf16.mxu0 0
        %1282 = vmatpush1.bf16.msra.mxu0 0
        %1283 = vmatprep.subr.bf16.mxu0 0
        %1284 = vmatpush1.bf16.msra.mxu0 0
        %1285 = vmatprep.subr.bf16.mxu0 0
        %1286 = vmatpush1.bf16.msra.mxu0 0
        %1287 = vmatprep.subr.bf16.mxu0 0
        %1288 = vmatpush1.bf16.msra.mxu0 0
        %1289 = vmatprep.subr.bf16.mxu0 0
        %1290 = vmatpush1.bf16.msra.mxu0 0
        %1291 = vmatprep.subr.bf16.mxu0 0
        %1292 = vmatpush1.bf16.msra.mxu0 0
        %1293 = vmatprep.subr.bf16.mxu0 0
        %1294 = vmatpush1.bf16.msra.mxu0 0
        %1295 = vmatprep.subr.bf16.mxu0 0
        %1296 = vmatpush1.bf16.msra.mxu0 0
        %1297 = vmatprep.subr.bf16.mxu0 0
        %1298 = vmatpush1.bf16.msra.mxu0 0
        %1299 = vmatprep.subr.bf16.mxu0 0
        %1300 = vmatpush1.bf16.msra.mxu0 0
        %1301 = vmatprep.subr.bf16.mxu0 0
        %1302 = vmatpush1.bf16.msra.mxu0 0
        %1303 = vmatprep.subr.bf16.mxu0 0
        %1304 = vmatpush1.bf16.msra.mxu0 0
        %1305 = vmatprep.subr.bf16.mxu0 0
        %1306 = vmatpush1.bf16.msra.mxu0 0
        %1307 = vmatprep.subr.bf16.mxu0 0
        %1308 = vmatpush1.bf16.msra.mxu0 0
        %1309 = vmatprep.mubr.bf16.mxu0 0
        %1310 = vmatmul.mubr.bf16.gmra.mrb[0].mxu0 %v1271
        %v1311 = vpop.f32.mrb[0].mxu0
        %v1312 = vadd.f32 0.0, %v1311
        %v1313 = vpop.f32.mrb[0].mxu0
        %v1314 = vpop.f32.mrb[0].mxu0
        %v1315 = vpop.f32.mrb[0].mxu0
        %1316 = vdwg.mxu0
        %v1318 = vsel %vm1037, %v1267, 0
        %v1321 = vsel %vm1273, %v1034, 0
        %1323 = vmatprep.subr.bf16.mxu0 0
        %1324 = vmatpush1.bf16.msra.mxu0 %v1321
        %1325 = vmatprep.subr.bf16.mxu0 0
        %1326 = vmatpush1.bf16.msra.mxu0 0
        %1327 = vmatprep.subr.bf16.mxu0 0
        %1328 = vmatpush1.bf16.msra.mxu0 0
        %1329 = vmatprep.subr.bf16.mxu0 0
        %1330 = vmatpush1.bf16.msra.mxu0 0
        %1331 = vmatprep.subr.bf16.mxu0 0
        %1332 = vmatpush1.bf16.msra.mxu0 0
        %1333 = vmatprep.subr.bf16.mxu0 0
        %1334 = vmatpush1.bf16.msra.mxu0 0
        %1335 = vmatprep.subr.bf16.mxu0 0
        %1336 = vmatpush1.bf16.msra.mxu0 0
        %1337 = vmatprep.subr.bf16.mxu0 0
        %1338 = vmatpush1.bf16.msra.mxu0 0
        %1339 = vmatprep.subr.bf16.mxu0 0
        %1340 = vmatpush1.bf16.msra.mxu0 0
        %1341 = vmatprep.subr.bf16.mxu0 0
        %1342 = vmatpush1.bf16.msra.mxu0 0
        %1343 = vmatprep.subr.bf16.mxu0 0
        %1344 = vmatpush1.bf16.msra.mxu0 0
        %1345 = vmatprep.subr.bf16.mxu0 0
        %1346 = vmatpush1.bf16.msra.mxu0 0
        %1347 = vmatprep.subr.bf16.mxu0 0
        %1348 = vmatpush1.bf16.msra.mxu0 0
        %1349 = vmatprep.subr.bf16.mxu0 0
        %1350 = vmatpush1.bf16.msra.mxu0 0
        %1351 = vmatprep.subr.bf16.mxu0 0
        %1352 = vmatpush1.bf16.msra.mxu0 0
        %1353 = vmatprep.subr.bf16.mxu0 0
        %1354 = vmatpush1.bf16.msra.mxu0 0
        %1355 = vmatprep.mubr.bf16.mxu0 0
        %1356 = vmatmul.mubr.bf16.gmra.mrb[0].mxu0 %v1318
        %v1357 = vpop.f32.mrb[0].mxu0
        %v1358 = vadd.f32 0.0, %v1357
        %v1359 = vpop.f32.mrb[0].mxu0
        %v1360 = vpop.f32.mrb[0].mxu0
        %v1361 = vpop.f32.mrb[0].mxu0
        %1362 = vdwg.mxu0
        %v1364 = vsel %vm1037, %v1268, 0
        %v1367 = vsel %vm1273, %v1035, 0
        %1369 = vmatprep.subr.bf16.mxu0 0
        %1370 = vmatpush1.bf16.msra.mxu0 %v1367
        %1371 = vmatprep.subr.bf16.mxu0 0
        %1372 = vmatpush1.bf16.msra.mxu0 0
        %1373 = vmatprep.subr.bf16.mxu0 0
        %1374 = vmatpush1.bf16.msra.mxu0 0
        %1375 = vmatprep.subr.bf16.mxu0 0
        %1376 = vmatpush1.bf16.msra.mxu0 0
        %1377 = vmatprep.subr.bf16.mxu0 0
        %1378 = vmatpush1.bf16.msra.mxu0 0
        %1379 = vmatprep.subr.bf16.mxu0 0
        %1380 = vmatpush1.bf16.msra.mxu0 0
        %1381 = vmatprep.subr.bf16.mxu0 0
        %1382 = vmatpush1.bf16.msra.mxu0 0
        %1383 = vmatprep.subr.bf16.mxu0 0
        %1384 = vmatpush1.bf16.msra.mxu0 0
        %1385 = vmatprep.subr.bf16.mxu0 0
        %1386 = vmatpush1.bf16.msra.mxu0 0
        %1387 = vmatprep.subr.bf16.mxu0 0
        %1388 = vmatpush1.bf16.msra.mxu0 0
        %1389 = vmatprep.subr.bf16.mxu0 0
        %1390 = vmatpush1.bf16.msra.mxu0 0
        %1391 = vmatprep.subr.bf16.mxu0 0
        %1392 = vmatpush1.bf16.msra.mxu0 0
        %1393 = vmatprep.subr.bf16.mxu0 0
        %1394 = vmatpush1.bf16.msra.mxu0 0
        %1395 = vmatprep.subr.bf16.mxu0 0
        %1396 = vmatpush1.bf16.msra.mxu0 0
        %1397 = vmatprep.subr.bf16.mxu0 0
        %1398 = vmatpush1.bf16.msra.mxu0 0
        %1399 = vmatprep.subr.bf16.mxu0 0
        %1400 = vmatpush1.bf16.msra.mxu0 0
        %1401 = vmatprep.mubr.bf16.mxu0 0
        %1402 = vmatmul.mubr.bf16.gmra.mrb[0].mxu0 %v1364
        %v1403 = vpop.f32.mrb[0].mxu0
        %v1404 = vadd.f32 0.0, %v1403
        %v1405 = vpop.f32.mrb[0].mxu0
        %v1406 = vpop.f32.mrb[0].mxu0
        %v1407 = vpop.f32.mrb[0].mxu0
        %1408 = vdwg.mxu0
        %v1410 = vsel %vm1037, %v1269, 0
        %v1413 = vsel %vm1273, %v1036, 0
        %1415 = vmatprep.subr.bf16.mxu0 0
        %1416 = vmatpush1.bf16.msra.mxu0 %v1413
        %1417 = vmatprep.subr.bf16.mxu0 0
        %1418 = vmatpush1.bf16.msra.mxu0 0
        %1419 = vmatprep.subr.bf16.mxu0 0
        %1420 = vmatpush1.bf16.msra.mxu0 0
        %1421 = vmatprep.subr.bf16.mxu0 0
        %1422 = vmatpush1.bf16.msra.mxu0 0
        %1423 = vmatprep.subr.bf16.mxu0 0
        %1424 = vmatpush1.bf16.msra.mxu0 0
        %1425 = vmatprep.subr.bf16.mxu0 0
        %1426 = vmatpush1.bf16.msra.mxu0 0
        %1427 = vmatprep.subr.bf16.mxu0 0
        %1428 = vmatpush1.bf16.msra.mxu0 0
        %1429 = vmatprep.subr.bf16.mxu0 0
        %1430 = vmatpush1.bf16.msra.mxu0 0
        %1431 = vmatprep.subr.bf16.mxu0 0
        %1432 = vmatpush1.bf16.msra.mxu0 0
        %1433 = vmatprep.subr.bf16.mxu0 0
        %1434 = vmatpush1.bf16.msra.mxu0 0
        %1435 = vmatprep.subr.bf16.mxu0 0
        %1436 = vmatpush1.bf16.msra.mxu0 0
        %1437 = vmatprep.subr.bf16.mxu0 0
        %1438 = vmatpush1.bf16.msra.mxu0 0
        %1439 = vmatprep.subr.bf16.mxu0 0
        %1440 = vmatpush1.bf16.msra.mxu0 0
        %1441 = vmatprep.subr.bf16.mxu0 0
        %1442 = vmatpush1.bf16.msra.mxu0 0
        %1443 = vmatprep.subr.bf16.mxu0 0
        %1444 = vmatpush1.bf16.msra.mxu0 0
        %1445 = vmatprep.subr.bf16.mxu0 0
        %1446 = vmatpush1.bf16.msra.mxu0 0
        %1447 = vmatprep.mubr.bf16.mxu0 0
        %1448 = vmatmul.mubr.bf16.gmra.mrb[0].mxu0 %v1410
        %v1449 = vpop.f32.mrb[0].mxu0
        %v1450 = vadd.f32 0.0, %v1449
        %v1451 = vpop.f32.mrb[0].mxu0
        %v1452 = vpop.f32.mrb[0].mxu0
        %v1453 = vpop.f32.mrb[0].mxu0
        %1454 = vdwg.mxu0
        %v1455 = vcombine.low %v1312, %v1404
        %v1456 = vcombine.high %v1312, %v1404
        %v1458 = vunpack.c.l.s4 1983009808
        %v1459 = vunpack.c.0.s8 %v1458
        %v1460 = vlaneseq
        %v1461 = vshrl.u32 %v1460, 7
        %v1462 = vsub.s32 %v1459, %v1461
        %v1463 = vrot.slane %v1455, %v1462
        %v1465 = vunpack.c.l.s4 1983009808
        %v1466 = vunpack.c.0.s8 %v1465
        %v1467 = vlaneseq
        %v1468 = vshrl.u32 %v1467, 7
        %v1469 = vsub.s32 %v1466, %v1468
        %v1470 = vrot.slane %v1456, %v1469
        %v1471 = vcombine.low %v1358, %v1450
        %v1472 = vcombine.high %v1358, %v1450
        %v1474 = vunpack.c.l.s4 1983009808
        %v1475 = vunpack.c.0.s8 %v1474
        %v1476 = vlaneseq
        %v1477 = vshrl.u32 %v1476, 7
        %v1478 = vsub.s32 %v1475, %v1477
        %v1479 = vrot.slane %v1471, %v1478
        %v1481 = vunpack.c.l.s4 1983009808
        %v1482 = vunpack.c.0.s8 %v1481
        %v1483 = vlaneseq
        %v1484 = vshrl.u32 %v1483, 7
        %v1485 = vsub.s32 %v1482, %v1484
        %v1486 = vrot.slane %v1472, %v1485
        %v1487 = vcombine.low %v1463, %v1479
        %v1488 = vcombine.high %v1463, %v1479
        %v1490 = vunpack.c.l.s4 1934713408
        %v1491 = vunpack.c.0.s8 %v1490
        %v1492 = vlaneseq
        %v1493 = vshrl.u32 %v1492, 7
        %v1494 = vsub.s32 %v1491, %v1493
        %v1495 = vrot.slane %v1487, %v1494
        %v1497 = vunpack.c.l.s4 1934713408
        %v1498 = vunpack.c.0.s8 %v1497
        %v1499 = vlaneseq
        %v1500 = vshrl.u32 %v1499, 7
        %v1501 = vsub.s32 %v1498, %v1500
        %v1502 = vrot.slane %v1488, %v1501
        %v1503 = vcombine.low %v1470, %v1486
        %v1504 = vcombine.high %v1470, %v1486
        %v1506 = vunpack.c.l.s4 1934713408
        %v1507 = vunpack.c.0.s8 %v1506
        %v1508 = vlaneseq
        %v1509 = vshrl.u32 %v1508, 7
        %v1510 = vsub.s32 %v1507, %v1509
        %v1511 = vrot.slane %v1503, %v1510
        %v1513 = vunpack.c.l.s4 1934713408
        %v1514 = vunpack.c.0.s8 %v1513
        %v1515 = vlaneseq
        %v1516 = vshrl.u32 %v1515, 7
        %v1517 = vsub.s32 %v1514, %v1516
        %v1518 = vrot.slane %v1504, %v1517
        %v1519 = vcombine.high %v1495, 0.0
        %v1520 = vcombine.high %v1502, 0.0
        %v1521 = vcombine.high %v1511, 0.0
        %v1522 = vcombine.high %v1518, 0.0
        %v1523 = vcombine.low %v1495, %v1502
        %v1525 = vunpack.c.l.s4 1983009808
        %v1526 = vunpack.c.0.s8 %v1525
        %v1527 = vlaneseq
        %v1528 = vshrl.u32 %v1527, 7
        %v1529 = vsub.s32 %v1526, %v1528
        %v1530 = vrot.slane %v1523, %v1529
        %v1531 = vcombine.low %v1519, %v1520
        %v1533 = vunpack.c.l.s4 1983009808
        %v1534 = vunpack.c.0.s8 %v1533
        %v1535 = vlaneseq
        %v1536 = vshrl.u32 %v1535, 7
        %v1537 = vsub.s32 %v1534, %v1536
        %v1538 = vrot.slane %v1531, %v1537
        %v1539 = vcombine.low %v1511, %v1518
        %v1541 = vunpack.c.l.s4 1983009808
        %v1542 = vunpack.c.0.s8 %v1541
        %v1543 = vlaneseq
        %v1544 = vshrl.u32 %v1543, 7
        %v1545 = vsub.s32 %v1542, %v1544
        %v1546 = vrot.slane %v1539, %v1545
        %v1547 = vcombine.low %v1521, %v1522
        %v1549 = vunpack.c.l.s4 1983009808
        %v1550 = vunpack.c.0.s8 %v1549
        %v1551 = vlaneseq
        %v1552 = vshrl.u32 %v1551, 7
        %v1553 = vsub.s32 %v1550, %v1552
        %v1554 = vrot.slane %v1547, %v1553
        %v1555 = vcombine.low %v1530, %v1538
        %v1556 = vcombine.high %v1530, %v1538
        %v1558 = vunpack.c.l.s4 1934713408
        %v1559 = vunpack.c.0.s8 %v1558
        %v1560 = vlaneseq
        %v1561 = vshrl.u32 %v1560, 7
        %v1562 = vsub.s32 %v1559, %v1561
        %v1563 = vrot.slane %v1555, %v1562
        %v1565 = vunpack.c.l.s4 1934713408
        %v1566 = vunpack.c.0.s8 %v1565
        %v1567 = vlaneseq
        %v1568 = vshrl.u32 %v1567, 7
        %v1569 = vsub.s32 %v1566, %v1568
        %v1570 = vrot.slane %v1556, %v1569
        %v1571 = vcombine.low %v1546, %v1554
        %v1572 = vcombine.high %v1546, %v1554
        %v1574 = vunpack.c.l.s4 1934713408
        %v1575 = vunpack.c.0.s8 %v1574
        %v1576 = vlaneseq
        %v1577 = vshrl.u32 %v1576, 7
        %v1578 = vsub.s32 %v1575, %v1577
        %v1579 = vrot.slane %v1571, %v1578
        %v1581 = vunpack.c.l.s4 1934713408
        %v1582 = vunpack.c.0.s8 %v1581
        %v1583 = vlaneseq
        %v1584 = vshrl.u32 %v1583, 7
        %v1585 = vsub.s32 %v1582, %v1584
        %v1586 = vrot.slane %v1572, %v1585
        %v1587 = vcombine.low %v1563, %v1579
        %v1588 = vcombine.high %v1563, %v1579
        %v1589 = vcombine.low %v1570, %v1586
        %v1590 = vcombine.high %v1570, %v1586
        %1592 = vrot.lane.b32.xlu0 %v1588, 8
        %v1593 = vpop.permute.xlu0 %1592
        %1596 = vrot.lane.b32.xlu0 %v1589, 16
        %v1597 = vpop.permute.xlu0 %1596
        %1600 = vrot.lane.b32.xlu0 %v1590, 24
        %v1601 = vpop.permute.xlu0 %1600
        %v1603 = vsel %vm1037, %v1587, %v1593
        %vm1604 = vcmask 130048
        %v1605 = vsel %vm1604, %v1603, %v1597
        %vm1606 = vcmask 195584
        %v1607 = vsel %vm1606, %v1605, %v1601
        %v1608 = vpack.c.bf16 %v1607, %v1607
        %v1609 = vld [vmem:[%s3] sm:$0xf]
        %v1610 = vld [vmem:[%s3 + $0x4] sm:$0xf]
        %v1611 = vld [vmem:[%s3 + $0x8] sm:$0xf]
        %v1612 = vld [vmem:[%s3 + $0xc] sm:$0xf]
        %v1613 = vld [vmem:[%s4] sm:$0x1]
        %v1615 = vlaneseq
        %v1616 = vshrl.u32 %v1615, 7
        %v1617 = vsub.s32 0, %v1616
        %v1618 = vrot.slane %v1613, %v1617
        %v1624 = vunpack.c.l.b16 %v1609
        %v1625 = vunpack.c.l.b16 %v1610
        %v1626 = vunpack.c.l.b16 %v1611
        %v1627 = vunpack.c.l.b16 %v1612
        %v1628 = vpack.c.b16 %v1625, %v1624
        %v1629 = vpack.c.b16 %v1627, %v1626
        %v1633 = vsel %vm531, %v1608, 0
        %1635 = vmatprep.subr.bf16.mxu0 0
        %1636 = vmatpush1.bf16.msra.mxu0 %v1628
        %1637 = vmatprep.subr.bf16.mxu0 0
        %1638 = vmatpush1.bf16.msra.mxu0 %v1629
        %1639 = vmatprep.subr.bf16.mxu0 0
        %1640 = vmatpush1.bf16.msra.mxu0 0
        %1641 = vmatprep.subr.bf16.mxu0 0
        %1642 = vmatpush1.bf16.msra.mxu0 0
        %1643 = vmatprep.subr.bf16.mxu0 0
        %1644 = vmatpush1.bf16.msra.mxu0 0
        %1645 = vmatprep.subr.bf16.mxu0 0
        %1646 = vmatpush1.bf16.msra.mxu0 0
        %1647 = vmatprep.subr.bf16.mxu0 0
        %1648 = vmatpush1.bf16.msra.mxu0 0
        %1649 = vmatprep.subr.bf16.mxu0 0
        %1650 = vmatpush1.bf16.msra.mxu0 0
        %1651 = vmatprep.subr.bf16.mxu0 0
        %1652 = vmatpush1.bf16.msra.mxu0 0
        %1653 = vmatprep.subr.bf16.mxu0 0
        %1654 = vmatpush1.bf16.msra.mxu0 0
        %1655 = vmatprep.subr.bf16.mxu0 0
        %1656 = vmatpush1.bf16.msra.mxu0 0
        %1657 = vmatprep.subr.bf16.mxu0 0
        %1658 = vmatpush1.bf16.msra.mxu0 0
        %1659 = vmatprep.subr.bf16.mxu0 0
        %1660 = vmatpush1.bf16.msra.mxu0 0
        %1661 = vmatprep.subr.bf16.mxu0 0
        %1662 = vmatpush1.bf16.msra.mxu0 0
        %1663 = vmatprep.subr.bf16.mxu0 0
        %1664 = vmatpush1.bf16.msra.mxu0 0
        %1665 = vmatprep.subr.bf16.mxu0 0
        %1666 = vmatpush1.bf16.msra.mxu0 0
        %1667 = vmatprep.mubr.bf16.mxu0 0
        %1668 = vmatmul.mubr.bf16.gmra.mrb[0].mxu0 %v1633
        %v1669 = vpop.f32.mrb[0].mxu0
        %v1670 = vadd.f32 %v1618, %v1669
        %v1671 = vpop.f32.mrb[0].mxu0
        %v1672 = vpop.f32.mrb[0].mxu0
        %v1673 = vpop.f32.mrb[0].mxu0
        %1674 = vdwg.mxu0
        %v1675 = vadd.f32 %v506, %v1670
        %v1676 = vld [vmem:[%s5] sm:$0x1]
        %v1677 = vld [vmem:[%s6] sm:$0x1]
        %v1678 = vsel %vm531, %v1675, 0.0
        %1679 = vadd.xlane.f32.xlu0 %v1678
        %v1680 = vpop.xlane.xlu0 %1679
        %v1681 = vrcp.pop 32.0
        %v1682 = vmul.f32 %v1680, %v1681
        %v1683 = vmul.f32 %v1675, %v1675
        %v1684 = vsel %vm531, %v1683, 0.0
        %1685 = vadd.xlane.f32.xlu0 %v1684
        %v1686 = vpop.xlane.xlu0 %1685
        %v1687 = vmul.f32 %v1686, %v1681
        %v1688 = vmul.f32 %v1682, %v1682
        %v1689 = vsub.f32 %v1687, %v1688
        %v1690 = vsub.f32 %v1675, %v1682
        %v1691 = vadd.f32 %v1689, 1e-05
        %v1692 = vrsqrt.pop %v1691
        %v1693 = vmul.f32 %v1690, %v1692
        %v1695 = vlaneseq
        %v1696 = vshrl.u32 %v1695, 7
        %v1697 = vsub.s32 0, %v1696
        %v1698 = vrot.slane %v1676, %v1697
        %v1700 = vmul.f32 %v1693, %v1698
        %v1702 = vlaneseq
        %v1703 = vshrl.u32 %v1702, 7
        %v1704 = vsub.s32 0, %v1703
        %v1705 = vrot.slane %v1677, %v1704
        %v1707 = vadd.f32 %v1700, %v1705
        %v1708 = vpack.c.bf16 %v1707, %v1707
        %v1709 = vld [vmem:[#allocation2] sm:$0xf]
        %v1710 = vld [vmem:[#allocation2 + $0x4] sm:$0xf]
        %v1711 = vld [vmem:[#allocation2 + $0x8] sm:$0xf]
        %v1712 = vld [vmem:[#allocation2 + $0xc] sm:$0xf]
        %v1713 = vld [vmem:[%s8] sm:$0x1]
        %v1715 = vlaneseq
        %v1716 = vshrl.u32 %v1715, 7
        %v1717 = vsub.s32 0, %v1716
        %v1718 = vrot.slane %v1713, %v1717
        %v1724 = vunpack.c.l.b16 %v1709
        %v1725 = vunpack.c.l.b16 %v1710
        %v1726 = vunpack.c.l.b16 %v1711
        %v1727 = vunpack.c.l.b16 %v1712
        %v1728 = vpack.c.b16 %v1725, %v1724
        %v1729 = vpack.c.b16 %v1727, %v1726
        %v1733 = vsel %vm531, %v1708, 0
        %1735 = vmatprep.subr.bf16.mxu0 0
        %1736 = vmatpush1.bf16.msra.mxu0 %v1728
        %1737 = vmatprep.subr.bf16.mxu0 0
        %1738 = vmatpush1.bf16.msra.mxu0 %v1729
        %1739 = vmatprep.subr.bf16.mxu0 0
        %1740 = vmatpush1.bf16.msra.mxu0 0
        %1741 = vmatprep.subr.bf16.mxu0 0
        %1742 = vmatpush1.bf16.msra.mxu0 0
        %1743 = vmatprep.subr.bf16.mxu0 0
        %1744 = vmatpush1.bf16.msra.mxu0 0
        %1745 = vmatprep.subr.bf16.mxu0 0
        %1746 = vmatpush1.bf16.msra.mxu0 0
        %1747 = vmatprep.subr.bf16.mxu0 0
        %1748 = vmatpush1.bf16.msra.mxu0 0
        %1749 = vmatprep.subr.bf16.mxu0 0
        %1750 = vmatpush1.bf16.msra.mxu0 0
        %1751 = vmatprep.subr.bf16.mxu0 0
        %1752 = vmatpush1.bf16.msra.mxu0 0
        %1753 = vmatprep.subr.bf16.mxu0 0
        %1754 = vmatpush1.bf16.msra.mxu0 0
        %1755 = vmatprep.subr.bf16.mxu0 0
        %1756 = vmatpush1.bf16.msra.mxu0 0
        %1757 = vmatprep.subr.bf16.mxu0 0
        %1758 = vmatpush1.bf16.msra.mxu0 0
        %1759 = vmatprep.subr.bf16.mxu0 0
        %1760 = vmatpush1.bf16.msra.mxu0 0
        %1761 = vmatprep.subr.bf16.mxu0 0
        %1762 = vmatpush1.bf16.msra.mxu0 0
        %1763 = vmatprep.subr.bf16.mxu0 0
        %1764 = vmatpush1.bf16.msra.mxu0 0
        %1765 = vmatprep.subr.bf16.mxu0 0
        %1766 = vmatpush1.bf16.msra.mxu0 0
        %1767 = vmatprep.mubr.bf16.mxu0 0
        %1768 = vmatmul.mubr.bf16.gmra.mrb[0].mxu0 %v1733
        %v1769 = vpop.f32.mrb[0].mxu0
        %v1770 = vadd.f32 %v1718, %v1769
        %v1771 = vpop.f32.mrb[0].mxu0
        %v1772 = vpop.f32.mrb[0].mxu0
        %v1773 = vpop.f32.mrb[0].mxu0
        %1774 = vdwg.mxu0
        %v1775 = vmax.f32 %v1770, 0.0
        %v1776 = vpack.c.bf16 %v1775, %v1775
        %v1777 = vld [vmem:[%s9] sm:$0xf]
        %v1778 = vld [vmem:[%s9 + $0x4] sm:$0xf]
        %v1779 = vld [vmem:[%s9 + $0x8] sm:$0xf]
        %v1780 = vld [vmem:[%s9 + $0xc] sm:$0xf]
        %v1781 = vld [vmem:[%s9 + $0x10] sm:$0xf]
        %v1782 = vld [vmem:[%s9 + $0x14] sm:$0xf]
        %v1783 = vld [vmem:[%s9 + $0x18] sm:$0xf]
        %v1784 = vld [vmem:[%s9 + $0x1c] sm:$0xf]
        %v1785 = vld [vmem:[%s10] sm:$0x1]
        %v1787 = vlaneseq
        %v1788 = vshrl.u32 %v1787, 7
        %v1789 = vsub.s32 0, %v1788
        %v1790 = vrot.slane %v1785, %v1789
        %v1800 = vunpack.c.l.b16 %v1777
        %v1801 = vunpack.c.l.b16 %v1778
        %v1802 = vunpack.c.l.b16 %v1779
        %v1803 = vunpack.c.l.b16 %v1780
        %v1804 = vunpack.c.l.b16 %v1781
        %v1805 = vunpack.c.l.b16 %v1782
        %v1806 = vunpack.c.l.b16 %v1783
        %v1807 = vunpack.c.l.b16 %v1784
        %v1808 = vpack.c.b16 %v1801, %v1800
        %v1809 = vpack.c.b16 %v1803, %v1802
        %v1810 = vpack.c.b16 %v1805, %v1804
        %v1811 = vpack.c.b16 %v1807, %v1806
        %vm1816 = vcmask 523264
        %v1818 = vsel %vm1816, %v1776, 0
        %1820 = vmatprep.subr.bf16.mxu0 0
        %1821 = vmatpush1.bf16.msra.mxu0 %v1808
        %1822 = vmatprep.subr.bf16.mxu0 0
        %1823 = vmatpush1.bf16.msra.mxu0 %v1809
        %1824 = vmatprep.subr.bf16.mxu0 0
        %1825 = vmatpush1.bf16.msra.mxu0 %v1810
        %1826 = vmatprep.subr.bf16.mxu0 0
        %1827 = vmatpush1.bf16.msra.mxu0 %v1811
        %1828 = vmatprep.subr.bf16.mxu0 0
        %1829 = vmatpush1.bf16.msra.mxu0 0
        %1830 = vmatprep.subr.bf16.mxu0 0
        %1831 = vmatpush1.bf16.msra.mxu0 0
        %1832 = vmatprep.subr.bf16.mxu0 0
        %1833 = vmatpush1.bf16.msra.mxu0 0
        %1834 = vmatprep.subr.bf16.mxu0 0
        %1835 = vmatpush1.bf16.msra.mxu0 0
        %1836 = vmatprep.subr.bf16.mxu0 0
        %1837 = vmatpush1.bf16.msra.mxu0 0
        %1838 = vmatprep.subr.bf16.mxu0 0
        %1839 = vmatpush1.bf16.msra.mxu0 0
        %1840 = vmatprep.subr.bf16.mxu0 0
        %1841 = vmatpush1.bf16.msra.mxu0 0
        %1842 = vmatprep.subr.bf16.mxu0 0
        %1843 = vmatpush1.bf16.msra.mxu0 0
        %1844 = vmatprep.subr.bf16.mxu0 0
        %1845 = vmatpush1.bf16.msra.mxu0 0
        %1846 = vmatprep.subr.bf16.mxu0 0
        %1847 = vmatpush1.bf16.msra.mxu0 0
        %1848 = vmatprep.subr.bf16.mxu0 0
        %1849 = vmatpush1.bf16.msra.mxu0 0
        %1850 = vmatprep.subr.bf16.mxu0 0
        %1851 = vmatpush1.bf16.msra.mxu0 0
        %1852 = vmatprep.mubr.bf16.mxu0 0
        %1853 = vmatmul.mubr.bf16.gmra.mrb[0].mxu0 %v1818
        %v1854 = vpop.f32.mrb[0].mxu0
        %v1855 = vadd.f32 %v1790, %v1854
        %v1856 = vpop.f32.mrb[0].mxu0
        %v1857 = vpop.f32.mrb[0].mxu0
        %v1858 = vpop.f32.mrb[0].mxu0
        %1859 = vdwg.mxu0
        %v1860 = vadd.f32 %v1707, %v1855
        %v1861 = vld [vmem:[%s11] sm:$0x1]
        %v1862 = vld [vmem:[%s12] sm:$0x1]
        %v1863 = vsel %vm531, %v1860, 0.0
        %1864 = vadd.xlane.f32.xlu0 %v1863
        %v1865 = vpop.xlane.xlu0 %1864
        %v1866 = vmul.f32 %v1865, %v1681
        %v1867 = vmul.f32 %v1860, %v1860
        %v1868 = vsel %vm531, %v1867, 0.0
        %1869 = vadd.xlane.f32.xlu0 %v1868
        %v1870 = vpop.xlane.xlu0 %1869
        %v1871 = vmul.f32 %v1870, %v1681
        %v1872 = vmul.f32 %v1866, %v1866
        %v1873 = vsub.f32 %v1871, %v1872
        %v1874 = vsub.f32 %v1860, %v1866
        %v1875 = vadd.f32 %v1873, 1e-05
        %v1876 = vrsqrt.pop %v1875
        %v1877 = vmul.f32 %v1874, %v1876
        %v1879 = vlaneseq
        %v1880 = vshrl.u32 %v1879, 7
        %v1881 = vsub.s32 0, %v1880
        %v1882 = vrot.slane %v1861, %v1881
        %v1884 = vmul.f32 %v1877, %v1882
        %v1886 = vlaneseq
        %v1887 = vshrl.u32 %v1886, 7
        %v1888 = vsub.s32 0, %v1887
        %v1889 = vrot.slane %v1862, %v1888
        %v1891 = vadd.f32 %v1884, %v1889
        %1892 = vst.msk [vmem:[%s500] sm:$0xff] %vm531, %v1891
        %s1893 = sand.u32 %s358, 1
        %s1894 = scalar_lea.sflag [#allocation4], %s1893
        %s1895 = sand.u32 %s358, 1
        %s1896 = smul.addr %s1895, 8
        %s1897 = scalar_lea.vmem [#allocation5], %s1896
        // Predicated region
        $region85: #{tpu_custom_call.1} parent=79 // pred_check
          %p1898 = pneg %p368
        $region86: #{tpu_custom_call.1} parent=79 // pred_check_branch
          %1900 = sbr.rel (%p1898) target = $region88
        $region87: #{tpu_custom_call.1} parent=79 // pred_region
          %s1902 = ssub.s32 128, 128
          %1903 = vsyncadd %s1894, %s1902
          %s1904 = smul.addr %s30, 128
          %s1905 = scalar_lea.hbm %s15, %s1904
          %s1907 = sshll.u32 %s1897, 4
          %s1908 = int_to_ptr.vmem [resolvable:$true] %s1907
          %1910 = dma.vmem_to_hbm [thread:$0]  %s1908, 128, %s1905, %s1894
        $region88: #{tpu_custom_call.1} parent=79 // pred_fallthru
          _
      $region80: #{tpu_custom_call.1} parent=5 // pred_fallthru
        _
      %p1911 = scmp.le.s32.totalorder 2, %s25
      // Predicated region
      $region89: #{tpu_custom_call.1} parent=5 // pred_check
        %p1912 = pneg %p1911
      $region90: #{tpu_custom_call.1} parent=5 // pred_check_branch
        %1914 = sbr.rel (%p1912) target = $region92
      $region91: #{tpu_custom_call.1} parent=5 // pred_region
        %s1915 = ssub.s32 %s25, 2
        // Predicated region
        $region93: #{tpu_custom_call.1} parent=91 // pred_check
          %p1916 = pneg %p374
        $region94: #{tpu_custom_call.1} parent=91 // pred_check_branch
          %1918 = sbr.rel (%p1916) target = $region96
        $region95: #{tpu_custom_call.1} parent=91 // pred_region
          %s1919 = sand.u32 %s359, 1
          %s1920 = scalar_lea.sflag [#allocation4], %s1919
          %s1921 = sand.u32 %s359, 1
          %s1922 = smul.addr %s1921, 8
          %s1923 = scalar_lea.vmem [#allocation5], %s1922
          %1924 = dma.done %s1920, 128
        $region96: #{tpu_custom_call.1} parent=91 // pred_fallthru
          _
      $region92: #{tpu_custom_call.1} parent=5 // pred_fallthru
        _
    $region6: #{tpu_custom_call.1} parent=1 // loop_footer
      %s29 = sadd.s32 1, %s25
    $region7: #{tpu_custom_call.1} parent=1 // loop_footer_branch
      %24 = sbr.rel target = $region3
    $region8: #{tpu_custom_call.1} parent=1 // loop_exit
      _
    %1925 = vsyncpa [#allocation3], 1
    %s1926 = scalar_lea.sflag [#allocation3], 1
    %1927 = vsyncpa %s1926, 1
    %1928 = vsyncpa [#allocation4], 1
    %s1929 = scalar_lea.sflag [#allocation4], 1
    %1930 = vsyncpa %s1929, 1

</llo_original>
